<compile_context>
chip_gen: v7x
topology: tpu7x:2x2x1
jax: 0.10.0
libtpu: 0.0.40
codegen_flags: <defaults>
</compile_context>

<pallas_src>
import jax
import jax.numpy as jnp
from jax.experimental import pallas as pl
from jax.experimental.pallas import tpu as pltpu


# ----------------------------------------------------------------------------
# Pallas kernel
# ----------------------------------------------------------------------------
def sltcn_kernel(x_ref, wt_ref, w2_ref, srate_ref, lrate1_ref, out_ref):
    """Per grid step over a lane tile of M = B*N (m = m_tile lanes):

      x_ref      [K1, L*m]  bf16  im2col input, L folded l-major into lanes;
                                   row K1-1 is all ones (carries the conv bias)
      wt_ref     [2C, K1]   bf16  fused short|long conv weight (+ bias column)
      w2_ref     [L, C, K1] bf16  pre-fused mixing weight  mx[l]^T @ W_conv
                                   (+ fused bias column mx[l]^T @ b + bias_mx[l])
      srate_ref  [L, C, 1]  f32   short_rate
      lrate1_ref [L, C, 1]  f32   1 + long_rate
      out_ref    [L, C, m]        gated output (bf16 by default)
    """
    L, C, m = out_ref.shape
    x = x_ref[...]                                     # loaded once per step

    # One MXU matmul for both branches and ALL time steps (bias via ones-row):
    # [2C, K1] x [K1, L*m] -> [2C, L*m] f32.
    conv = jnp.dot(wt_ref[...], x, preferred_element_type=jnp.float32)

    # Static unroll over L (small); per-l work touches only 128-aligned lane
    # slices, so slicing is free and only [*, m]-sized temporaries are live.
    for l in range(L):
        lo = l * m
        conv_l = conv[:, lo:lo + m]                    # [2C, m]
        xl = x[:, lo:lo + m]                           # [K1, m]
        # Pre-fused mixing matmul: depends only on x, so it pipelines with the
        # big conv matmul instead of waiting on it.
        tmp = jnp.dot(w2_ref[l], xl, preferred_element_type=jnp.float32)  # [C, m]
        z = jax.nn.sigmoid(tmp)
        short_x = conv_l[:C, :]
        long_x = conv_l[C:, :]
        out_ref[l] = ((z + srate_ref[l]) * short_x
                      + (lrate1_ref[l] - z) * long_x).astype(out_ref.dtype)


# ----------------------------------------------------------------------------
# Tiling helpers (generation-aware VMEM budgets)
# ----------------------------------------------------------------------------
def _round_up(x, m):
    return ((x + m - 1) // m) * m


def _vmem_budget():
    """(vmem_limit_bytes, streamed-tile budget).  v5e/v6e have 128 MiB VMEM per
    core, v7x only 64 MiB, so budgets are picked per generation."""
    try:
        phys = int(pltpu.get_tpu_info().vmem_capacity_bytes)
    except Exception:                       # non-TPU backend / interpret mode
        phys = 64 * 1024 * 1024             # conservative (v7x-sized)
    if phys >= 100 * 1024 * 1024:           # v5e / v6e
        limit = 96 * 1024 * 1024
    else:                                   # v7x
        limit = 48 * 1024 * 1024
    # ~half of the scoped limit for the streamed/intermediate tiles; the rest
    # is headroom for resident weights, per-l transients and Mosaic scratch.
    return limit, limit // 2


def _pick_m_tile(L, K1, C, out_bytes, M, tile_budget):
    """Largest lane tile of M (multiple of 128, capped at 2048) whose
    double-buffered streamed blocks + f32 conv intermediate fit the budget;
    then split so the grid has >=2 steps when possible (v7x has 2 TCs)."""
    per_col = (2 * L * K1 * 2            # double-buffered bf16 input block
               + 2 * L * C * out_bytes   # double-buffered output block
               + L * 2 * C * 4           # f32 conv intermediate [2C, L*m]
               + 4 * C * 4)              # per-l epilogue transients
    if per_col * 128 > tile_budget:
        raise ValueError("SLTCN tile does not fit VMEM even at m_tile=128; "
                         "reduce residual_len/channels or raise the budget")
    m = (tile_budget // per_col) // 128 * 128
    m = max(128, min(2048, m))
    m = min(m, _round_up(M, 128))
    while m > 128 and _round_up(M, m) // m < 2:   # feed both v7x TensorCores
        m = max(128, (m // 2) // 128 * 128)
    return m, _round_up(M, m)


# ----------------------------------------------------------------------------
# Parameter packing + pallas_call wrapper
# ----------------------------------------------------------------------------
def _pack_fused_conv_weights(short_w, long_w, sks, lks, c_in, C):
    """Pack both branches' Conv2d weights [co_i, c_in, 1, k_i] into a single
    [k_max_long*c_in, 2C] matrix.  Tap placement (k_max_long - k_i) reproduces
    the PyTorch crop to the largest kernel's output length; the short branch
    lands at the same offsets inside the shared long window because
    long_padding - long_kmax == short_padding - short_kmax."""
    kl = lks[-1]
    w = jnp.zeros((kl, c_in, 2 * C), jnp.float32)
    for col0, w_list, kset in ((0, short_w, sks), (C, long_w, lks)):
        off = col0
        for wi, k in zip(w_list, kset):
            co = wi.shape[0]
            start = kl - k
            for jj in range(k):
                w = w.at[start + jj, :, off:off + co].set(
                    jnp.transpose(wi[:, :, 0, jj]))           # [c_in, co]
            off += co
    return w.reshape(kl * c_in, 2 * C)                        # row = tap*c_in + cin


def sltcn_forward_pallas(x, params, cfg, out_dtype=jnp.bfloat16):
    B, c_in, N, T = x.shape
    c_out_set = cfg['c_out_set']
    C = sum(c_out_set)
    sp, lp = cfg['short_padding'], cfg['long_padding']
    sks, lks = cfg['short_kernel_set'], cfg['long_kernel_set']
    ks, kl = sks[-1], lks[-1]
    L = T + sp - ks + 1
    assert L == T + lp - kl + 1, "short/long residual lengths must match"
    M = B * N
    K = kl * c_in
    K1 = K + 1                                  # +1 ones-row carries the conv bias

    out_bytes = jnp.dtype(out_dtype).itemsize
    vmem_limit, tile_budget = _vmem_budget()
    m_tile, M_pad = _pick_m_tile(L, K1, C, out_bytes, M, tile_budget)
    G = M_pad // m_tile

    # -- im2col once in the wrapper (bf16 throughout), then pre-tile so every
    #    grid step's input block is ONE contiguous HBM DMA with L folded
    #    l-major into the lane dim: [G, K1, L*m_tile].
    # TODO(synk): the im2col expands the input kl-x in HBM; for very long T the
    # compact [T+lp, c_in, M] array + in-kernel window assembly would cut that.
    xb = x.astype(jnp.bfloat16)
    xp = jnp.pad(xb, ((0, 0), (0, 0), (0, 0), (lp, 0)))            # [B,cin,N,T+lp]
    xp = jnp.transpose(xp, (3, 1, 0, 2)).reshape(T + lp, c_in, M)  # [T+lp,cin,M]
    xim = jnp.stack([xp[j:j + L] for j in range(kl)], axis=1)      # [L,kl,cin,M]
    xim = xim.reshape(L, K, M)
    xim = jnp.concatenate([xim, jnp.ones((L, 1, M), jnp.bfloat16)], axis=1)
    xim = jnp.pad(xim, ((0, 0), (0, 0), (0, M_pad - M)))           # [L,K1,M_pad]
    xim = jnp.transpose(xim, (1, 0, 2)).reshape(K1, L, G, m_tile)
    xim = jnp.transpose(xim, (2, 0, 1, 3)).reshape(G, K1, L * m_tile)

    # -- fused, pre-packed parameters (resident in VMEM across the grid) ------
    wt_core = _pack_fused_conv_weights(params['short_w'], params['long_w'],
                                       sks, lks, c_in, C).T        # [2C, K] f32
    b2 = jnp.concatenate(params['short_b'] + params['long_b'])     # [2C]
    wt = jnp.concatenate([wt_core, b2[:, None]], axis=1).astype(jnp.bfloat16)

    mxf = jnp.concatenate([jnp.swapaxes(params['short_mx'][0], 1, 2),
                           jnp.swapaxes(params['long_mx'][0], 1, 2)],
                          axis=2)                                  # [L, C, 2C] f32
    bmx = params['bias_mx'].reshape(L)
    # Pre-fuse the mixing path:  mx^T @ (W x + b) + bias_mx  ==  W2 x + b2'
    w2_core = jnp.einsum('lcd,dk->lck', mxf, wt_core)              # [L, C, K]
    w2_bias = jnp.einsum('lcd,d->lc', mxf, b2) + bmx[:, None]      # [L, C]
    w2 = jnp.concatenate([w2_core, w2_bias[:, :, None]],
                         axis=2).astype(jnp.bfloat16)              # [L, C, K1]

    srate = jnp.transpose(params['short_rate'][0, :, 0, :]).reshape(L, C, 1)
    lrate1 = 1.0 + jnp.transpose(params['long_rate'][0, :, 0, :]).reshape(L, C, 1)

    def const_spec(shape):
        return pl.BlockSpec(shape, lambda g: (0,) * len(shape))

    out = pl.pallas_call(
        sltcn_kernel,
        out_shape=jax.ShapeDtypeStruct((L, C, M_pad), out_dtype),
        grid=(G,),
        in_specs=[
            # streamed, contiguous per-step block; add pipeline_mode=pl.Buffered(3)
            # only if profiling shows exposed input DMA and VMEM headroom remains.
            pl.BlockSpec((None, K1, L * m_tile), lambda g: (g, 0, 0)),
            const_spec((2 * C, K1)),
            const_spec((L, C, K1)),
            const_spec((L, C, 1)),
            const_spec((L, C, 1)),
        ],
        out_specs=pl.BlockSpec((L, C, m_tile), lambda g: (0, 0, g)),
        compiler_params=pltpu.CompilerParams(
            dimension_semantics=("parallel",),       # both TCs on v7x when G >= 2
            vmem_limit_bytes=vmem_limit),
    )(xim, wt, w2, srate, lrate1)

    # TODO(synk): drop this transpose if the consumer can take [L, C, B*N] directly
    # (it is an extra full read+write of the output, done here on the narrow dtype).
    out = out[:, :, :M].reshape(L, C, B, N)
    return jnp.transpose(out, (2, 1, 3, 0))                        # [B, C, N, L]


# ----------------------------------------------------------------------------
# Parameter init (deterministic; mirrors the PyTorch module's shapes/inits)
# ----------------------------------------------------------------------------
def init_params(key, cfg):
    c_in, c_out_set = cfg['c_in'], cfg['c_out_set']
    C = sum(c_out_set)
    L = cfg['residual_len']
    keys = iter(jax.random.split(key, 32))

    def conv_params(kernel_set):
        ws, bs = [], []
        for co, k in zip(c_out_set, kernel_set):
            bound = 1.0 / ((c_in * k) ** 0.5)   # ~ PyTorch Conv2d default init
            ws.append(jax.random.uniform(next(keys), (co, c_in, 1, k),
                                         jnp.float32, -bound, bound))
            bs.append(jax.random.uniform(next(keys), (co,), jnp.float32,
                                         -bound, bound))
        return ws, bs

    short_w, short_b = conv_params(cfg['short_kernel_set'])
    long_w, long_b = conv_params(cfg['long_kernel_set'])
    mx_std = (2.0 / (L * C * C)) ** 0.5         # kaiming_normal_ on [1, L, C, C]
    return dict(
        short_w=short_w, short_b=short_b, long_w=long_w, long_b=long_b,
        short_mx=mx_std * jax.random.normal(next(keys), (1, L, C, C), jnp.float32),
        long_mx=mx_std * jax.random.normal(next(keys), (1, L, C, C), jnp.float32),
        bias_mx=jnp.zeros((1, L, 1, 1), jnp.float32),
        short_rate=jnp.full((1, C, 1, L), 0.5, jnp.float32),
        long_rate=jnp.full((1, C, 1, L), 0.5, jnp.float32),
        bias_end=jnp.zeros((1, C, 1, L), jnp.float32),  # unused in forward (as in PyTorch)
    )


# ----------------------------------------------------------------------------
# Pure-f32 JAX reference (mirrors the PyTorch forward op-for-op; no bf16 dots
# anywhere so it runs on any backend).
# ----------------------------------------------------------------------------
def ref_sltcn(x, params, cfg):
    def inception(x, padding, ws, bs):
        xp = jnp.pad(x, ((0, 0), (0, 0), (0, 0), (padding, 0)))
        outs = []
        for w, b in zip(ws, bs):
            o = jax.lax.conv_general_dilated(
                xp, w, window_strides=(1, 1), padding='VALID',
                dimension_numbers=('NCHW', 'OIHW', 'NCHW'))
            outs.append(o + b[None, :, None, None])
        Lr = outs[-1].shape[-1]
        return jnp.concatenate([o[..., -Lr:] for o in outs], axis=1)

    short_x = inception(x, cfg['short_padding'], params['short_w'], params['short_b'])
    long_x = inception(x, cfg['long_padding'], params['long_w'], params['long_b'])
    short_tmp = jnp.einsum('blnc,lcd->blnd',
                           jnp.transpose(short_x, (0, 3, 2, 1)), params['short_mx'][0])
    long_tmp = jnp.einsum('blnc,lcd->blnd',
                          jnp.transpose(long_x, (0, 3, 2, 1)), params['long_mx'][0])
    z = jax.nn.sigmoid(short_tmp + long_tmp + params['bias_mx'])
    z = jnp.transpose(z, (0, 3, 2, 1))
    return (z + params['short_rate']) * short_x \
        + (1.0 - z + params['long_rate']) * long_x


# ----------------------------------------------------------------------------
if __name__ == "__main__":
    cfg = dict(
        batch=2, c_in=4, num_nodes=16, seq_len=8,
        c_out_set=[8, 8, 16],
        short_kernel_set=[1, 2, 3], short_padding=2,
        long_kernel_set=[1, 3, 6],
    )
    # long_padding chosen (as the module's constructor requires) so both
    # branches produce the same residual length.
    cfg['long_padding'] = (cfg['short_padding']
                           + cfg['long_kernel_set'][-1] - cfg['short_kernel_set'][-1])
    cfg['residual_len'] = (cfg['seq_len'] - cfg['short_kernel_set'][-1] + 1
                           + cfg['short_padding'])

    key = jax.random.PRNGKey(0)
    pkey, xkey = jax.random.split(key)
    params = init_params(pkey, cfg)
    x = jax.random.normal(
        xkey, (cfg['batch'], cfg['c_in'], cfg['num_nodes'], cfg['seq_len']),
        jnp.float32)

    fwd = jax.jit(lambda xx: sltcn_forward_pallas(xx, params, cfg))
    y = jax.block_until_ready(fwd(x))                      # bf16 output (default)
    y_ref = jax.block_until_ready(ref_sltcn(x, params, cfg))  # exact f32 reference

    expect = (cfg['batch'], sum(cfg['c_out_set']), cfg['num_nodes'],
              cfg['residual_len'])
    assert y.shape == y_ref.shape == expect, (y.shape, y_ref.shape, expect)

    y32 = y.astype(jnp.float32)
    max_err = float(jnp.max(jnp.abs(y32 - y_ref)))
    rel_err = float(jnp.linalg.norm(y32 - y_ref) / jnp.linalg.norm(y_ref))
    # Kernel stores matmul operands and the output in bf16 (f32 accumulation),
    # so validate against the exact f32 reference with a bf16-sized tolerance.
    if max_err > 1e-1 or rel_err > 3e-2:
        raise AssertionError(
            f"mismatch vs f32 reference: max abs err={max_err}, rel err={rel_err}")
    print("KERNEL_OK")
</pallas_src>

<mosaic_0001>
module attributes {stable_mosaic.version = 11 : i64} {
  func.func @sltcn_kernel(%arg0: i32, %arg1: memref<1x25x1024xbf16, #tpu.memory_space<vmem>>, %arg2: memref<64x25xbf16, #tpu.memory_space<vmem>>, %arg3: memref<8x32x25xbf16, #tpu.memory_space<vmem>>, %arg4: memref<8x32x1xf32, #tpu.memory_space<vmem>>, %arg5: memref<8x32x1xf32, #tpu.memory_space<vmem>>, %arg6: memref<8x32x128xbf16, #tpu.memory_space<vmem>>) attributes {dimension_semantics = [#tpu.dimension_semantics<parallel>], iteration_bounds = array<i64: 1>, scalar_prefetch = 0 : i64, scratch_operands = 0 : i64, tpu.core_type = #tpu.core_type<tc>, window_params = [{transform_indices = @transform_0, window_bounds = array<i64: 1, 25, 1024>}, {pipeline_mode = #tpu.pipeline_mode<synchronous>, transform_indices = @transform_1, window_bounds = array<i64: 64, 25>}, {pipeline_mode = #tpu.pipeline_mode<synchronous>, transform_indices = @transform_2, window_bounds = array<i64: 8, 32, 25>}, {pipeline_mode = #tpu.pipeline_mode<synchronous>, transform_indices = @transform_3, window_bounds = array<i64: 8, 32, 1>}, {pipeline_mode = #tpu.pipeline_mode<synchronous>, transform_indices = @transform_4, window_bounds = array<i64: 8, 32, 1>}, {transform_indices = @transform_5, window_bounds = array<i64: 8, 32, 128>}]} {
    %c0 = arith.constant 0 : index
    %c0_0 = arith.constant 0 : index
    %c0_1 = arith.constant 0 : index
    %0 = vector.load %arg1[%c0, %c0_0, %c0_1] : memref<1x25x1024xbf16, #tpu.memory_space<vmem>>, vector<1x25x1024xbf16>
    %1 = vector.shape_cast %0 : vector<1x25x1024xbf16> to vector<25x1024xbf16>
    %c0_2 = arith.constant 0 : index
    %c0_3 = arith.constant 0 : index
    %2 = vector.load %arg2[%c0_2, %c0_3] : memref<64x25xbf16, #tpu.memory_space<vmem>>, vector<64x25xbf16>
    %cst = arith.constant dense<0.000000e+00> : vector<64x1024xf32>
    %3 = tpu.matmul %2, %1, %cst {dimension_numbers = #tpu.dot_dimension_numbers<[1], [0], [0], [1], [0, 0, 1, 1], [], []>} : vector<64x25xbf16>, vector<25x1024xbf16>, vector<64x1024xf32> -> vector<64x1024xf32>
    %4 = vector.extract_strided_slice %3 {offsets = [0, 0], sizes = [64, 128], strides = [1, 1]} : vector<64x1024xf32> to vector<64x128xf32>
    %5 = vector.extract_strided_slice %1 {offsets = [0, 0], sizes = [25, 128], strides = [1, 1]} : vector<25x1024xbf16> to vector<25x128xbf16>
    %c0_4 = arith.constant 0 : index
    %c0_5 = arith.constant 0 : index
    %c0_6 = arith.constant 0 : index
    %6 = vector.load %arg3[%c0_4, %c0_5, %c0_6] : memref<8x32x25xbf16, #tpu.memory_space<vmem>>, vector<1x32x25xbf16>
    %7 = vector.shape_cast %6 : vector<1x32x25xbf16> to vector<32x25xbf16>
    %cst_7 = arith.constant dense<0.000000e+00> : vector<32x128xf32>
    %8 = tpu.matmul %7, %5, %cst_7 {dimension_numbers = #tpu.dot_dimension_numbers<[1], [0], [0], [1], [0, 0, 1, 1], [], []>} : vector<32x25xbf16>, vector<25x128xbf16>, vector<32x128xf32> -> vector<32x128xf32>
    %9 = arith.negf %8 : vector<32x128xf32>
    %10 = math.exp %9 : vector<32x128xf32>
    %cst_8 = arith.constant 1.000000e+00 : f32
    %11 = vector.broadcast %cst_8 : f32 to vector<32x128xf32>
    %12 = arith.addf %11, %10 : vector<32x128xf32>
    %13 = arith.divf %11, %12 : vector<32x128xf32>
    %14 = vector.extract_strided_slice %4 {offsets = [0, 0], sizes = [32, 128], strides = [1, 1]} : vector<64x128xf32> to vector<32x128xf32>
    %15 = vector.extract_strided_slice %4 {offsets = [32, 0], sizes = [32, 128], strides = [1, 1]} : vector<64x128xf32> to vector<32x128xf32>
    %c0_9 = arith.constant 0 : index
    %c0_10 = arith.constant 0 : index
    %c0_11 = arith.constant 0 : index
    %16 = vector.load %arg4[%c0_9, %c0_10, %c0_11] : memref<8x32x1xf32, #tpu.memory_space<vmem>>, vector<1x32x1xf32>
    %17 = vector.shape_cast %16 : vector<1x32x1xf32> to vector<32x1xf32>
    %18 = vector.broadcast %17 : vector<32x1xf32> to vector<32x128xf32>
    %19 = arith.addf %13, %18 : vector<32x128xf32>
    %20 = arith.mulf %19, %14 : vector<32x128xf32>
    %c0_12 = arith.constant 0 : index
    %c0_13 = arith.constant 0 : index
    %c0_14 = arith.constant 0 : index
    %21 = vector.load %arg5[%c0_12, %c0_13, %c0_14] : memref<8x32x1xf32, #tpu.memory_space<vmem>>, vector<1x32x1xf32>
    %22 = vector.shape_cast %21 : vector<1x32x1xf32> to vector<32x1xf32>
    %23 = vector.broadcast %22 : vector<32x1xf32> to vector<32x128xf32>
    %24 = arith.subf %23, %13 : vector<32x128xf32>
    %25 = arith.mulf %24, %15 : vector<32x128xf32>
    %26 = arith.addf %20, %25 : vector<32x128xf32>
    %27 = arith.truncf %26 : vector<32x128xf32> to vector<32x128xbf16>
    %c0_15 = arith.constant 0 : index
    %c0_16 = arith.constant 0 : index
    %c0_17 = arith.constant 0 : index
    %28 = vector.load %arg6[%c0_15, %c0_16, %c0_17] : memref<8x32x128xbf16, #tpu.memory_space<vmem>>, vector<1x32x128xbf16>
    %29 = vector.shape_cast %28 : vector<1x32x128xbf16> to vector<32x128xbf16>
    %30 = vector.shape_cast %27 : vector<32x128xbf16> to vector<1x32x128xbf16>
    tpu.vector_store %arg6[%c0_15, %c0_16, %c0_17], %30 {strides = array<i32>} : memref<8x32x128xbf16, #tpu.memory_space<vmem>>, vector<1x32x128xbf16>,
    %31 = vector.extract_strided_slice %3 {offsets = [0, 128], sizes = [64, 128], strides = [1, 1]} : vector<64x1024xf32> to vector<64x128xf32>
    %32 = vector.extract_strided_slice %1 {offsets = [0, 128], sizes = [25, 128], strides = [1, 1]} : vector<25x1024xbf16> to vector<25x128xbf16>
    %c1 = arith.constant 1 : index
    %c0_18 = arith.constant 0 : index
    %c0_19 = arith.constant 0 : index
    %33 = vector.load %arg3[%c1, %c0_18, %c0_19] : memref<8x32x25xbf16, #tpu.memory_space<vmem>>, vector<1x32x25xbf16>
    %34 = vector.shape_cast %33 : vector<1x32x25xbf16> to vector<32x25xbf16>
    %cst_20 = arith.constant dense<0.000000e+00> : vector<32x128xf32>
    %35 = tpu.matmul %34, %32, %cst_20 {dimension_numbers = #tpu.dot_dimension_numbers<[1], [0], [0], [1], [0, 0, 1, 1], [], []>} : vector<32x25xbf16>, vector<25x128xbf16>, vector<32x128xf32> -> vector<32x128xf32>
    %36 = arith.negf %35 : vector<32x128xf32>
    %37 = math.exp %36 : vector<32x128xf32>
    %cst_21 = arith.constant 1.000000e+00 : f32
    %38 = vector.broadcast %cst_21 : f32 to vector<32x128xf32>
    %39 = arith.addf %38, %37 : vector<32x128xf32>
    %40 = arith.divf %38, %39 : vector<32x128xf32>
    %41 = vector.extract_strided_slice %31 {offsets = [0, 0], sizes = [32, 128], strides = [1, 1]} : vector<64x128xf32> to vector<32x128xf32>
    %42 = vector.extract_strided_slice %31 {offsets = [32, 0], sizes = [32, 128], strides = [1, 1]} : vector<64x128xf32> to vector<32x128xf32>
    %c1_22 = arith.constant 1 : index
    %c0_23 = arith.constant 0 : index
    %c0_24 = arith.constant 0 : index
    %43 = vector.load %arg4[%c1_22, %c0_23, %c0_24] : memref<8x32x1xf32, #tpu.memory_space<vmem>>, vector<1x32x1xf32>
    %44 = vector.shape_cast %43 : vector<1x32x1xf32> to vector<32x1xf32>
    %45 = vector.broadcast %44 : vector<32x1xf32> to vector<32x128xf32>
    %46 = arith.addf %40, %45 : vector<32x128xf32>
    %47 = arith.mulf %46, %41 : vector<32x128xf32>
    %c1_25 = arith.constant 1 : index
    %c0_26 = arith.constant 0 : index
    %c0_27 = arith.constant 0 : index
    %48 = vector.load %arg5[%c1_25, %c0_26, %c0_27] : memref<8x32x1xf32, #tpu.memory_space<vmem>>, vector<1x32x1xf32>
    %49 = vector.shape_cast %48 : vector<1x32x1xf32> to vector<32x1xf32>
    %50 = vector.broadcast %49 : vector<32x1xf32> to vector<32x128xf32>
    %51 = arith.subf %50, %40 : vector<32x128xf32>
    %52 = arith.mulf %51, %42 : vector<32x128xf32>
    %53 = arith.addf %47, %52 : vector<32x128xf32>
    %54 = arith.truncf %53 : vector<32x128xf32> to vector<32x128xbf16>
    %c1_28 = arith.constant 1 : index
    %c0_29 = arith.constant 0 : index
    %c0_30 = arith.constant 0 : index
    %55 = vector.load %arg6[%c1_28, %c0_29, %c0_30] : memref<8x32x128xbf16, #tpu.memory_space<vmem>>, vector<1x32x128xbf16>
    %56 = vector.shape_cast %55 : vector<1x32x128xbf16> to vector<32x128xbf16>
    %57 = vector.shape_cast %54 : vector<32x128xbf16> to vector<1x32x128xbf16>
    tpu.vector_store %arg6[%c1_28, %c0_29, %c0_30], %57 {strides = array<i32>} : memref<8x32x128xbf16, #tpu.memory_space<vmem>>, vector<1x32x128xbf16>,
    %58 = vector.extract_strided_slice %3 {offsets = [0, 256], sizes = [64, 128], strides = [1, 1]} : vector<64x1024xf32> to vector<64x128xf32>
    %59 = vector.extract_strided_slice %1 {offsets = [0, 256], sizes = [25, 128], strides = [1, 1]} : vector<25x1024xbf16> to vector<25x128xbf16>
    %c2 = arith.constant 2 : index
    %c0_31 = arith.constant 0 : index
    %c0_32 = arith.constant 0 : index
    %60 = vector.load %arg3[%c2, %c0_31, %c0_32] : memref<8x32x25xbf16, #tpu.memory_space<vmem>>, vector<1x32x25xbf16>
    %61 = vector.shape_cast %60 : vector<1x32x25xbf16> to vector<32x25xbf16>
    %cst_33 = arith.constant dense<0.000000e+00> : vector<32x128xf32>
    %62 = tpu.matmul %61, %59, %cst_33 {dimension_numbers = #tpu.dot_dimension_numbers<[1], [0], [0], [1], [0, 0, 1, 1], [], []>} : vector<32x25xbf16>, vector<25x128xbf16>, vector<32x128xf32> -> vector<32x128xf32>
    %63 = arith.negf %62 : vector<32x128xf32>
    %64 = math.exp %63 : vector<32x128xf32>
    %cst_34 = arith.constant 1.000000e+00 : f32
    %65 = vector.broadcast %cst_34 : f32 to vector<32x128xf32>
    %66 = arith.addf %65, %64 : vector<32x128xf32>
    %67 = arith.divf %65, %66 : vector<32x128xf32>
    %68 = vector.extract_strided_slice %58 {offsets = [0, 0], sizes = [32, 128], strides = [1, 1]} : vector<64x128xf32> to vector<32x128xf32>
    %69 = vector.extract_strided_slice %58 {offsets = [32, 0], sizes = [32, 128], strides = [1, 1]} : vector<64x128xf32> to vector<32x128xf32>
    %c2_35 = arith.constant 2 : index
    %c0_36 = arith.constant 0 : index
    %c0_37 = arith.constant 0 : index
    %70 = vector.load %arg4[%c2_35, %c0_36, %c0_37] : memref<8x32x1xf32, #tpu.memory_space<vmem>>, vector<1x32x1xf32>
    %71 = vector.shape_cast %70 : vector<1x32x1xf32> to vector<32x1xf32>
    %72 = vector.broadcast %71 : vector<32x1xf32> to vector<32x128xf32>
    %73 = arith.addf %67, %72 : vector<32x128xf32>
    %74 = arith.mulf %73, %68 : vector<32x128xf32>
    %c2_38 = arith.constant 2 : index
    %c0_39 = arith.constant 0 : index
    %c0_40 = arith.constant 0 : index
    %75 = vector.load %arg5[%c2_38, %c0_39, %c0_40] : memref<8x32x1xf32, #tpu.memory_space<vmem>>, vector<1x32x1xf32>
    %76 = vector.shape_cast %75 : vector<1x32x1xf32> to vector<32x1xf32>
    %77 = vector.broadcast %76 : vector<32x1xf32> to vector<32x128xf32>
    %78 = arith.subf %77, %67 : vector<32x128xf32>
    %79 = arith.mulf %78, %69 : vector<32x128xf32>
    %80 = arith.addf %74, %79 : vector<32x128xf32>
    %81 = arith.truncf %80 : vector<32x128xf32> to vector<32x128xbf16>
    %c2_41 = arith.constant 2 : index
    %c0_42 = arith.constant 0 : index
    %c0_43 = arith.constant 0 : index
    %82 = vector.load %arg6[%c2_41, %c0_42, %c0_43] : memref<8x32x128xbf16, #tpu.memory_space<vmem>>, vector<1x32x128xbf16>
    %83 = vector.shape_cast %82 : vector<1x32x128xbf16> to vector<32x128xbf16>
    %84 = vector.shape_cast %81 : vector<32x128xbf16> to vector<1x32x128xbf16>
    tpu.vector_store %arg6[%c2_41, %c0_42, %c0_43], %84 {strides = array<i32>} : memref<8x32x128xbf16, #tpu.memory_space<vmem>>, vector<1x32x128xbf16>,
    %85 = vector.extract_strided_slice %3 {offsets = [0, 384], sizes = [64, 128], strides = [1, 1]} : vector<64x1024xf32> to vector<64x128xf32>
    %86 = vector.extract_strided_slice %1 {offsets = [0, 384], sizes = [25, 128], strides = [1, 1]} : vector<25x1024xbf16> to vector<25x128xbf16>
    %c3 = arith.constant 3 : index
    %c0_44 = arith.constant 0 : index
    %c0_45 = arith.constant 0 : index
    %87 = vector.load %arg3[%c3, %c0_44, %c0_45] : memref<8x32x25xbf16, #tpu.memory_space<vmem>>, vector<1x32x25xbf16>
    %88 = vector.shape_cast %87 : vector<1x32x25xbf16> to vector<32x25xbf16>
    %cst_46 = arith.constant dense<0.000000e+00> : vector<32x128xf32>
    %89 = tpu.matmul %88, %86, %cst_46 {dimension_numbers = #tpu.dot_dimension_numbers<[1], [0], [0], [1], [0, 0, 1, 1], [], []>} : vector<32x25xbf16>, vector<25x128xbf16>, vector<32x128xf32> -> vector<32x128xf32>
    %90 = arith.negf %89 : vector<32x128xf32>
    %91 = math.exp %90 : vector<32x128xf32>
    %cst_47 = arith.constant 1.000000e+00 : f32
    %92 = vector.broadcast %cst_47 : f32 to vector<32x128xf32>
    %93 = arith.addf %92, %91 : vector<32x128xf32>
    %94 = arith.divf %92, %93 : vector<32x128xf32>
    %95 = vector.extract_strided_slice %85 {offsets = [0, 0], sizes = [32, 128], strides = [1, 1]} : vector<64x128xf32> to vector<32x128xf32>
    %96 = vector.extract_strided_slice %85 {offsets = [32, 0], sizes = [32, 128], strides = [1, 1]} : vector<64x128xf32> to vector<32x128xf32>
    %c3_48 = arith.constant 3 : index
    %c0_49 = arith.constant 0 : index
    %c0_50 = arith.constant 0 : index
    %97 = vector.load %arg4[%c3_48, %c0_49, %c0_50] : memref<8x32x1xf32, #tpu.memory_space<vmem>>, vector<1x32x1xf32>
    %98 = vector.shape_cast %97 : vector<1x32x1xf32> to vector<32x1xf32>
    %99 = vector.broadcast %98 : vector<32x1xf32> to vector<32x128xf32>
    %100 = arith.addf %94, %99 : vector<32x128xf32>
    %101 = arith.mulf %100, %95 : vector<32x128xf32>
    %c3_51 = arith.constant 3 : index
    %c0_52 = arith.constant 0 : index
    %c0_53 = arith.constant 0 : index
    %102 = vector.load %arg5[%c3_51, %c0_52, %c0_53] : memref<8x32x1xf32, #tpu.memory_space<vmem>>, vector<1x32x1xf32>
    %103 = vector.shape_cast %102 : vector<1x32x1xf32> to vector<32x1xf32>
    %104 = vector.broadcast %103 : vector<32x1xf32> to vector<32x128xf32>
    %105 = arith.subf %104, %94 : vector<32x128xf32>
    %106 = arith.mulf %105, %96 : vector<32x128xf32>
    %107 = arith.addf %101, %106 : vector<32x128xf32>
    %108 = arith.truncf %107 : vector<32x128xf32> to vector<32x128xbf16>
    %c3_54 = arith.constant 3 : index
    %c0_55 = arith.constant 0 : index
    %c0_56 = arith.constant 0 : index
    %109 = vector.load %arg6[%c3_54, %c0_55, %c0_56] : memref<8x32x128xbf16, #tpu.memory_space<vmem>>, vector<1x32x128xbf16>
    %110 = vector.shape_cast %109 : vector<1x32x128xbf16> to vector<32x128xbf16>
    %111 = vector.shape_cast %108 : vector<32x128xbf16> to vector<1x32x128xbf16>
    tpu.vector_store %arg6[%c3_54, %c0_55, %c0_56], %111 {strides = array<i32>} : memref<8x32x128xbf16, #tpu.memory_space<vmem>>, vector<1x32x128xbf16>,
    %112 = vector.extract_strided_slice %3 {offsets = [0, 512], sizes = [64, 128], strides = [1, 1]} : vector<64x1024xf32> to vector<64x128xf32>
    %113 = vector.extract_strided_slice %1 {offsets = [0, 512], sizes = [25, 128], strides = [1, 1]} : vector<25x1024xbf16> to vector<25x128xbf16>
    %c4 = arith.constant 4 : index
    %c0_57 = arith.constant 0 : index
    %c0_58 = arith.constant 0 : index
    %114 = vector.load %arg3[%c4, %c0_57, %c0_58] : memref<8x32x25xbf16, #tpu.memory_space<vmem>>, vector<1x32x25xbf16>
    %115 = vector.shape_cast %114 : vector<1x32x25xbf16> to vector<32x25xbf16>
    %cst_59 = arith.constant dense<0.000000e+00> : vector<32x128xf32>
    %116 = tpu.matmul %115, %113, %cst_59 {dimension_numbers = #tpu.dot_dimension_numbers<[1], [0], [0], [1], [0, 0, 1, 1], [], []>} : vector<32x25xbf16>, vector<25x128xbf16>, vector<32x128xf32> -> vector<32x128xf32>
    %117 = arith.negf %116 : vector<32x128xf32>
    %118 = math.exp %117 : vector<32x128xf32>
    %cst_60 = arith.constant 1.000000e+00 : f32
    %119 = vector.broadcast %cst_60 : f32 to vector<32x128xf32>
    %120 = arith.addf %119, %118 : vector<32x128xf32>
    %121 = arith.divf %119, %120 : vector<32x128xf32>
    %122 = vector.extract_strided_slice %112 {offsets = [0, 0], sizes = [32, 128], strides = [1, 1]} : vector<64x128xf32> to vector<32x128xf32>
    %123 = vector.extract_strided_slice %112 {offsets = [32, 0], sizes = [32, 128], strides = [1, 1]} : vector<64x128xf32> to vector<32x128xf32>
    %c4_61 = arith.constant 4 : index
    %c0_62 = arith.constant 0 : index
    %c0_63 = arith.constant 0 : index
    %124 = vector.load %arg4[%c4_61, %c0_62, %c0_63] : memref<8x32x1xf32, #tpu.memory_space<vmem>>, vector<1x32x1xf32>
    %125 = vector.shape_cast %124 : vector<1x32x1xf32> to vector<32x1xf32>
    %126 = vector.broadcast %125 : vector<32x1xf32> to vector<32x128xf32>
    %127 = arith.addf %121, %126 : vector<32x128xf32>
    %128 = arith.mulf %127, %122 : vector<32x128xf32>
    %c4_64 = arith.constant 4 : index
    %c0_65 = arith.constant 0 : index
    %c0_66 = arith.constant 0 : index
    %129 = vector.load %arg5[%c4_64, %c0_65, %c0_66] : memref<8x32x1xf32, #tpu.memory_space<vmem>>, vector<1x32x1xf32>
    %130 = vector.shape_cast %129 : vector<1x32x1xf32> to vector<32x1xf32>
    %131 = vector.broadcast %130 : vector<32x1xf32> to vector<32x128xf32>
    %132 = arith.subf %131, %121 : vector<32x128xf32>
    %133 = arith.mulf %132, %123 : vector<32x128xf32>
    %134 = arith.addf %128, %133 : vector<32x128xf32>
    %135 = arith.truncf %134 : vector<32x128xf32> to vector<32x128xbf16>
    %c4_67 = arith.constant 4 : index
    %c0_68 = arith.constant 0 : index
    %c0_69 = arith.constant 0 : index
    %136 = vector.load %arg6[%c4_67, %c0_68, %c0_69] : memref<8x32x128xbf16, #tpu.memory_space<vmem>>, vector<1x32x128xbf16>
    %137 = vector.shape_cast %136 : vector<1x32x128xbf16> to vector<32x128xbf16>
    %138 = vector.shape_cast %135 : vector<32x128xbf16> to vector<1x32x128xbf16>
    tpu.vector_store %arg6[%c4_67, %c0_68, %c0_69], %138 {strides = array<i32>} : memref<8x32x128xbf16, #tpu.memory_space<vmem>>, vector<1x32x128xbf16>,
    %139 = vector.extract_strided_slice %3 {offsets = [0, 640], sizes = [64, 128], strides = [1, 1]} : vector<64x1024xf32> to vector<64x128xf32>
    %140 = vector.extract_strided_slice %1 {offsets = [0, 640], sizes = [25, 128], strides = [1, 1]} : vector<25x1024xbf16> to vector<25x128xbf16>
    %c5 = arith.constant 5 : index
    %c0_70 = arith.constant 0 : index
    %c0_71 = arith.constant 0 : index
    %141 = vector.load %arg3[%c5, %c0_70, %c0_71] : memref<8x32x25xbf16, #tpu.memory_space<vmem>>, vector<1x32x25xbf16>
    %142 = vector.shape_cast %141 : vector<1x32x25xbf16> to vector<32x25xbf16>
    %cst_72 = arith.constant dense<0.000000e+00> : vector<32x128xf32>
    %143 = tpu.matmul %142, %140, %cst_72 {dimension_numbers = #tpu.dot_dimension_numbers<[1], [0], [0], [1], [0, 0, 1, 1], [], []>} : vector<32x25xbf16>, vector<25x128xbf16>, vector<32x128xf32> -> vector<32x128xf32>
    %144 = arith.negf %143 : vector<32x128xf32>
    %145 = math.exp %144 : vector<32x128xf32>
    %cst_73 = arith.constant 1.000000e+00 : f32
    %146 = vector.broadcast %cst_73 : f32 to vector<32x128xf32>
    %147 = arith.addf %146, %145 : vector<32x128xf32>
    %148 = arith.divf %146, %147 : vector<32x128xf32>
    %149 = vector.extract_strided_slice %139 {offsets = [0, 0], sizes = [32, 128], strides = [1, 1]} : vector<64x128xf32> to vector<32x128xf32>
    %150 = vector.extract_strided_slice %139 {offsets = [32, 0], sizes = [32, 128], strides = [1, 1]} : vector<64x128xf32> to vector<32x128xf32>
    %c5_74 = arith.constant 5 : index
    %c0_75 = arith.constant 0 : index
    %c0_76 = arith.constant 0 : index
    %151 = vector.load %arg4[%c5_74, %c0_75, %c0_76] : memref<8x32x1xf32, #tpu.memory_space<vmem>>, vector<1x32x1xf32>
    %152 = vector.shape_cast %151 : vector<1x32x1xf32> to vector<32x1xf32>
    %153 = vector.broadcast %152 : vector<32x1xf32> to vector<32x128xf32>
    %154 = arith.addf %148, %153 : vector<32x128xf32>
    %155 = arith.mulf %154, %149 : vector<32x128xf32>
    %c5_77 = arith.constant 5 : index
    %c0_78 = arith.constant 0 : index
    %c0_79 = arith.constant 0 : index
    %156 = vector.load %arg5[%c5_77, %c0_78, %c0_79] : memref<8x32x1xf32, #tpu.memory_space<vmem>>, vector<1x32x1xf32>
    %157 = vector.shape_cast %156 : vector<1x32x1xf32> to vector<32x1xf32>
    %158 = vector.broadcast %157 : vector<32x1xf32> to vector<32x128xf32>
    %159 = arith.subf %158, %148 : vector<32x128xf32>
    %160 = arith.mulf %159, %150 : vector<32x128xf32>
    %161 = arith.addf %155, %160 : vector<32x128xf32>
    %162 = arith.truncf %161 : vector<32x128xf32> to vector<32x128xbf16>
    %c5_80 = arith.constant 5 : index
    %c0_81 = arith.constant 0 : index
    %c0_82 = arith.constant 0 : index
    %163 = vector.load %arg6[%c5_80, %c0_81, %c0_82] : memref<8x32x128xbf16, #tpu.memory_space<vmem>>, vector<1x32x128xbf16>
    %164 = vector.shape_cast %163 : vector<1x32x128xbf16> to vector<32x128xbf16>
    %165 = vector.shape_cast %162 : vector<32x128xbf16> to vector<1x32x128xbf16>
    tpu.vector_store %arg6[%c5_80, %c0_81, %c0_82], %165 {strides = array<i32>} : memref<8x32x128xbf16, #tpu.memory_space<vmem>>, vector<1x32x128xbf16>,
    %166 = vector.extract_strided_slice %3 {offsets = [0, 768], sizes = [64, 128], strides = [1, 1]} : vector<64x1024xf32> to vector<64x128xf32>
    %167 = vector.extract_strided_slice %1 {offsets = [0, 768], sizes = [25, 128], strides = [1, 1]} : vector<25x1024xbf16> to vector<25x128xbf16>
    %c6 = arith.constant 6 : index
    %c0_83 = arith.constant 0 : index
    %c0_84 = arith.constant 0 : index
    %168 = vector.load %arg3[%c6, %c0_83, %c0_84] : memref<8x32x25xbf16, #tpu.memory_space<vmem>>, vector<1x32x25xbf16>
    %169 = vector.shape_cast %168 : vector<1x32x25xbf16> to vector<32x25xbf16>
    %cst_85 = arith.constant dense<0.000000e+00> : vector<32x128xf32>
    %170 = tpu.matmul %169, %167, %cst_85 {dimension_numbers = #tpu.dot_dimension_numbers<[1], [0], [0], [1], [0, 0, 1, 1], [], []>} : vector<32x25xbf16>, vector<25x128xbf16>, vector<32x128xf32> -> vector<32x128xf32>
    %171 = arith.negf %170 : vector<32x128xf32>
    %172 = math.exp %171 : vector<32x128xf32>
    %cst_86 = arith.constant 1.000000e+00 : f32
    %173 = vector.broadcast %cst_86 : f32 to vector<32x128xf32>
    %174 = arith.addf %173, %172 : vector<32x128xf32>
    %175 = arith.divf %173, %174 : vector<32x128xf32>
    %176 = vector.extract_strided_slice %166 {offsets = [0, 0], sizes = [32, 128], strides = [1, 1]} : vector<64x128xf32> to vector<32x128xf32>
    %177 = vector.extract_strided_slice %166 {offsets = [32, 0], sizes = [32, 128], strides = [1, 1]} : vector<64x128xf32> to vector<32x128xf32>
    %c6_87 = arith.constant 6 : index
    %c0_88 = arith.constant 0 : index
    %c0_89 = arith.constant 0 : index
    %178 = vector.load %arg4[%c6_87, %c0_88, %c0_89] : memref<8x32x1xf32, #tpu.memory_space<vmem>>, vector<1x32x1xf32>
    %179 = vector.shape_cast %178 : vector<1x32x1xf32> to vector<32x1xf32>
    %180 = vector.broadcast %179 : vector<32x1xf32> to vector<32x128xf32>
    %181 = arith.addf %175, %180 : vector<32x128xf32>
    %182 = arith.mulf %181, %176 : vector<32x128xf32>
    %c6_90 = arith.constant 6 : index
    %c0_91 = arith.constant 0 : index
    %c0_92 = arith.constant 0 : index
    %183 = vector.load %arg5[%c6_90, %c0_91, %c0_92] : memref<8x32x1xf32, #tpu.memory_space<vmem>>, vector<1x32x1xf32>
    %184 = vector.shape_cast %183 : vector<1x32x1xf32> to vector<32x1xf32>
    %185 = vector.broadcast %184 : vector<32x1xf32> to vector<32x128xf32>
    %186 = arith.subf %185, %175 : vector<32x128xf32>
    %187 = arith.mulf %186, %177 : vector<32x128xf32>
    %188 = arith.addf %182, %187 : vector<32x128xf32>
    %189 = arith.truncf %188 : vector<32x128xf32> to vector<32x128xbf16>
    %c6_93 = arith.constant 6 : index
    %c0_94 = arith.constant 0 : index
    %c0_95 = arith.constant 0 : index
    %190 = vector.load %arg6[%c6_93, %c0_94, %c0_95] : memref<8x32x128xbf16, #tpu.memory_space<vmem>>, vector<1x32x128xbf16>
    %191 = vector.shape_cast %190 : vector<1x32x128xbf16> to vector<32x128xbf16>
    %192 = vector.shape_cast %189 : vector<32x128xbf16> to vector<1x32x128xbf16>
    tpu.vector_store %arg6[%c6_93, %c0_94, %c0_95], %192 {strides = array<i32>} : memref<8x32x128xbf16, #tpu.memory_space<vmem>>, vector<1x32x128xbf16>,
    %193 = vector.extract_strided_slice %3 {offsets = [0, 896], sizes = [64, 128], strides = [1, 1]} : vector<64x1024xf32> to vector<64x128xf32>
    %194 = vector.extract_strided_slice %1 {offsets = [0, 896], sizes = [25, 128], strides = [1, 1]} : vector<25x1024xbf16> to vector<25x128xbf16>
    %c7 = arith.constant 7 : index
    %c0_96 = arith.constant 0 : index
    %c0_97 = arith.constant 0 : index
    %195 = vector.load %arg3[%c7, %c0_96, %c0_97] : memref<8x32x25xbf16, #tpu.memory_space<vmem>>, vector<1x32x25xbf16>
    %196 = vector.shape_cast %195 : vector<1x32x25xbf16> to vector<32x25xbf16>
    %cst_98 = arith.constant dense<0.000000e+00> : vector<32x128xf32>
    %197 = tpu.matmul %196, %194, %cst_98 {dimension_numbers = #tpu.dot_dimension_numbers<[1], [0], [0], [1], [0, 0, 1, 1], [], []>} : vector<32x25xbf16>, vector<25x128xbf16>, vector<32x128xf32> -> vector<32x128xf32>
    %198 = arith.negf %197 : vector<32x128xf32>
    %199 = math.exp %198 : vector<32x128xf32>
    %cst_99 = arith.constant 1.000000e+00 : f32
    %200 = vector.broadcast %cst_99 : f32 to vector<32x128xf32>
    %201 = arith.addf %200, %199 : vector<32x128xf32>
    %202 = arith.divf %200, %201 : vector<32x128xf32>
    %203 = vector.extract_strided_slice %193 {offsets = [0, 0], sizes = [32, 128], strides = [1, 1]} : vector<64x128xf32> to vector<32x128xf32>
    %204 = vector.extract_strided_slice %193 {offsets = [32, 0], sizes = [32, 128], strides = [1, 1]} : vector<64x128xf32> to vector<32x128xf32>
    %c7_100 = arith.constant 7 : index
    %c0_101 = arith.constant 0 : index
    %c0_102 = arith.constant 0 : index
    %205 = vector.load %arg4[%c7_100, %c0_101, %c0_102] : memref<8x32x1xf32, #tpu.memory_space<vmem>>, vector<1x32x1xf32>
    %206 = vector.shape_cast %205 : vector<1x32x1xf32> to vector<32x1xf32>
    %207 = vector.broadcast %206 : vector<32x1xf32> to vector<32x128xf32>
    %208 = arith.addf %202, %207 : vector<32x128xf32>
    %209 = arith.mulf %208, %203 : vector<32x128xf32>
    %c7_103 = arith.constant 7 : index
    %c0_104 = arith.constant 0 : index
    %c0_105 = arith.constant 0 : index
    %210 = vector.load %arg5[%c7_103, %c0_104, %c0_105] : memref<8x32x1xf32, #tpu.memory_space<vmem>>, vector<1x32x1xf32>
    %211 = vector.shape_cast %210 : vector<1x32x1xf32> to vector<32x1xf32>
    %212 = vector.broadcast %211 : vector<32x1xf32> to vector<32x128xf32>
    %213 = arith.subf %212, %202 : vector<32x128xf32>
    %214 = arith.mulf %213, %204 : vector<32x128xf32>
    %215 = arith.addf %209, %214 : vector<32x128xf32>
    %216 = arith.truncf %215 : vector<32x128xf32> to vector<32x128xbf16>
    %c7_106 = arith.constant 7 : index
    %c0_107 = arith.constant 0 : index
    %c0_108 = arith.constant 0 : index
    %217 = vector.load %arg6[%c7_106, %c0_107, %c0_108] : memref<8x32x128xbf16, #tpu.memory_space<vmem>>, vector<1x32x128xbf16>
    %218 = vector.shape_cast %217 : vector<1x32x128xbf16> to vector<32x128xbf16>
    %219 = vector.shape_cast %216 : vector<32x128xbf16> to vector<1x32x128xbf16>
    tpu.vector_store %arg6[%c7_106, %c0_107, %c0_108], %219 {strides = array<i32>} : memref<8x32x128xbf16, #tpu.memory_space<vmem>>, vector<1x32x128xbf16>,
    return
  }
  func.func @transform_0(%arg0: i32) -> (i32, i32, i32) {
    %c0_i32 = arith.constant 0 : i32
    %c0_i32_0 = arith.constant 0 : i32
    %c0_i32_1 = arith.constant 0 : i32
    return %arg0, %c0_i32, %c0_i32_0 : i32, i32, i32
  }
  func.func @transform_1(%arg0: i32) -> (i32, i32) {
    %c0_i32 = arith.constant 0 : i32
    %c0_i32_0 = arith.constant 0 : i32
    %c0_i32_1 = arith.constant 0 : i32
    return %c0_i32, %c0_i32_0 : i32, i32
  }
  func.func @transform_2(%arg0: i32) -> (i32, i32, i32) {
    %c0_i32 = arith.constant 0 : i32
    %c0_i32_0 = arith.constant 0 : i32
    %c0_i32_1 = arith.constant 0 : i32
    %c0_i32_2 = arith.constant 0 : i32
    return %c0_i32, %c0_i32_0, %c0_i32_1 : i32, i32, i32
  }
  func.func @transform_3(%arg0: i32) -> (i32, i32, i32) {
    %c0_i32 = arith.constant 0 : i32
    %c0_i32_0 = arith.constant 0 : i32
    %c0_i32_1 = arith.constant 0 : i32
    %c0_i32_2 = arith.constant 0 : i32
    return %c0_i32, %c0_i32_0, %c0_i32_1 : i32, i32, i32
  }
  func.func @transform_4(%arg0: i32) -> (i32, i32, i32) {
    %c0_i32 = arith.constant 0 : i32
    %c0_i32_0 = arith.constant 0 : i32
    %c0_i32_1 = arith.constant 0 : i32
    %c0_i32_2 = arith.constant 0 : i32
    return %c0_i32, %c0_i32_0, %c0_i32_1 : i32, i32, i32
  }
  func.func @transform_5(%arg0: i32) -> (i32, i32, i32) {
    %c0_i32 = arith.constant 0 : i32
    %c0_i32_0 = arith.constant 0 : i32
    %c0_i32_1 = arith.constant 0 : i32
    return %c0_i32, %c0_i32_0, %arg0 : i32, i32, i32
  }
}

</mosaic_0001>

<llo_original>
// kernel: _lambda_.1
$region0: #{_lambda_.1}
  #allocation0 [shape = 'u32[]', space=smem, size = 0x4, offset = 0x4, fixed_abs, tag = 'smem constant byte address 0x4 - core index']
  #allocation1 [shape = 'u32[144,128]{1,0:T(1,128)}', space=vmem, size = 0x12000, scoped, tag = 'internal scratch']
  %s0 = inlined_call_operand.vmem [shape: bf16[1,25,1024], index: 0, kind: input, shape index: {}]
  %s1 = inlined_call_operand.vmem [shape: bf16[64,25], index: 1, kind: input, shape index: {}]
  %s2 = inlined_call_operand.vmem [shape: bf16[8,32,25], index: 2, kind: input, shape index: {}]
  %s3 = inlined_call_operand.vmem [shape: f32[8,32,1], index: 3, kind: input, shape index: {}]
  %s4 = inlined_call_operand.vmem [shape: f32[8,32,1], index: 4, kind: input, shape index: {}]
  %s5 = inlined_call_operand.vmem [shape: bf16[8,32,128], index: 5, kind: output, shape index: {}]
  %s6 = sld [smem:[#allocation0]]
  $region30: #{_lambda_.1} parent=0
    _
  %s8 = ssub.s32 1, %s6
  %s9 = scalar_select 0, %s8, %s6
  // Predicated region
  $region2: #{_lambda_.1} parent=0 // pred_check
    _
  $region3: #{_lambda_.1} parent=0 // pred_check_branch
    %11 = sbr.rel (0) target = $region5
  $region4: #{_lambda_.1} parent=0 // pred_region
    _
  $region5: #{_lambda_.1} parent=0 // pred_fallthru
    _
  // Predicated region
  $region6: #{_lambda_.1} parent=0 // pred_check
    _
  $region7: #{_lambda_.1} parent=0 // pred_check_branch
    %13 = sbr.rel (0) target = $region9
  $region8: #{_lambda_.1} parent=0 // pred_region
    _
  $region9: #{_lambda_.1} parent=0 // pred_fallthru
    _
  // Predicated region
  $region10: #{_lambda_.1} parent=0 // pred_check
    _
  $region11: #{_lambda_.1} parent=0 // pred_check_branch
    %15 = sbr.rel (0) target = $region13
  $region12: #{_lambda_.1} parent=0 // pred_region
    _
  $region13: #{_lambda_.1} parent=0 // pred_fallthru
    _
  // Predicated region
  $region14: #{_lambda_.1} parent=0 // pred_check
    _
  $region15: #{_lambda_.1} parent=0 // pred_check_branch
    %17 = sbr.rel (0) target = $region17
  $region16: #{_lambda_.1} parent=0 // pred_region
    _
  $region17: #{_lambda_.1} parent=0 // pred_fallthru
    _
  // Predicated region
  $region18: #{_lambda_.1} parent=0 // pred_check
    _
  $region19: #{_lambda_.1} parent=0 // pred_check_branch
    %19 = sbr.rel (0) target = $region21
  $region20: #{_lambda_.1} parent=0 // pred_region
    _
  $region21: #{_lambda_.1} parent=0 // pred_fallthru
    _
  %v21 = vld [vmem:[%s0] sm:$0xff]
  %v22 = vld [vmem:[%s0 + $0x8] sm:$0xff]
  %v23 = vld [vmem:[%s0 + $0x10] sm:$0xff]
  %v24 = vld [vmem:[%s0 + $0x18] sm:$0xff]
  %v25 = vld [vmem:[%s0 + $0x20] sm:$0xff]
  %v26 = vld [vmem:[%s0 + $0x28] sm:$0xff]
  %v27 = vld [vmem:[%s0 + $0x30] sm:$0xff]
  %v28 = vld [vmem:[%s0 + $0x38] sm:$0xff]
  %v29 = vld [vmem:[%s0 + $0x40] sm:$0xff]
  %v30 = vld [vmem:[%s0 + $0x48] sm:$0xff]
  %v31 = vld [vmem:[%s0 + $0x50] sm:$0xff]
  %v32 = vld [vmem:[%s0 + $0x58] sm:$0xff]
  %v33 = vld [vmem:[%s0 + $0x60] sm:$0x11]
  %v34 = vld [vmem:[%s0 + $0x68] sm:$0x11]
  %v35 = vld [vmem:[%s0 + $0x70] sm:$0x11]
  %v36 = vld [vmem:[%s0 + $0x78] sm:$0x11]
  %v37 = vld [vmem:[%s1] sm:$0xf]
  %v38 = vld [vmem:[%s1 + $0x4] sm:$0xf]
  %v39 = vld [vmem:[%s1 + $0x8] sm:$0xf]
  %v40 = vld [vmem:[%s1 + $0xc] sm:$0xf]
  %v41 = vld [vmem:[%s1 + $0x10] sm:$0xf]
  %v42 = vld [vmem:[%s1 + $0x14] sm:$0xf]
  %v43 = vld [vmem:[%s1 + $0x18] sm:$0xf]
  %v44 = vld [vmem:[%s1 + $0x1c] sm:$0xf]
  %v53 = vunpack.c.l.b16 %v37
  %v54 = vunpack.c.l.b16 %v38
  %v55 = vunpack.c.l.b16 %v39
  %v56 = vunpack.c.l.b16 %v40
  %v57 = vunpack.c.l.b16 %v41
  %v58 = vunpack.c.l.b16 %v42
  %v59 = vunpack.c.l.b16 %v43
  %v60 = vunpack.c.l.b16 %v44
  %v61 = vpack.c.b16 %v54, %v53
  %v62 = vpack.c.b16 %v56, %v55
  %v63 = vpack.c.b16 %v58, %v57
  %v64 = vpack.c.b16 %v60, %v59
  %v81 = vunpack.c.l.b16 %v21
  %v82 = vunpack.c.h.b16 %v21
  %v83 = vunpack.c.l.b16 %v22
  %v84 = vunpack.c.h.b16 %v22
  %v85 = vunpack.c.l.b16 %v23
  %v86 = vunpack.c.h.b16 %v23
  %v87 = vunpack.c.l.b16 %v24
  %v88 = vunpack.c.h.b16 %v24
  %v89 = vunpack.c.l.b16 %v25
  %v90 = vunpack.c.h.b16 %v25
  %v91 = vunpack.c.l.b16 %v26
  %v92 = vunpack.c.h.b16 %v26
  %v93 = vunpack.c.l.b16 %v27
  %v94 = vunpack.c.h.b16 %v27
  %v95 = vunpack.c.l.b16 %v28
  %v96 = vunpack.c.h.b16 %v28
  %v97 = vunpack.c.l.b16 %v29
  %v98 = vunpack.c.h.b16 %v29
  %v99 = vunpack.c.l.b16 %v30
  %v100 = vunpack.c.h.b16 %v30
  %v101 = vunpack.c.l.b16 %v31
  %v102 = vunpack.c.h.b16 %v31
  %v103 = vunpack.c.l.b16 %v32
  %v104 = vunpack.c.h.b16 %v32
  %v105 = vunpack.c.l.b16 %v33
  %v106 = vunpack.c.h.b16 %v33
  %v107 = vunpack.c.l.b16 %v34
  %v108 = vunpack.c.h.b16 %v34
  %v109 = vunpack.c.l.b16 %v35
  %v110 = vunpack.c.h.b16 %v35
  %v111 = vunpack.c.l.b16 %v36
  %v112 = vunpack.c.h.b16 %v36
  %v113 = vpack.c.b16 %v89, %v81
  %v114 = vpack.c.b16 %v90, %v82
  %v115 = vpack.c.b16 %v91, %v83
  %v116 = vpack.c.b16 %v92, %v84
  %v117 = vpack.c.b16 %v93, %v85
  %v118 = vpack.c.b16 %v94, %v86
  %v119 = vpack.c.b16 %v95, %v87
  %v120 = vpack.c.b16 %v96, %v88
  %v121 = vpack.c.b16 %v105, %v97
  %v122 = vpack.c.b16 %v106, %v98
  %v123 = vpack.c.b16 %v107, %v99
  %v124 = vpack.c.b16 %v108, %v100
  %v125 = vpack.c.b16 %v109, %v101
  %v126 = vpack.c.b16 %v110, %v102
  %v127 = vpack.c.b16 %v111, %v103
  %v128 = vpack.c.b16 %v112, %v104
  %vm137 = vcmask 203776
  %v139 = vsel %vm137, %v61, 0
  %v142 = vsel %vm137, %v62, 0
  %v145 = vsel %vm137, %v63, 0
  %v148 = vsel %vm137, %v64, 0
  %vm150 = vcmask 1043456
  %vm151 = vcmask 1044480
  %v152 = vsel %vm150, 4294967295, 65535
  %v153 = vsel %vm151, %v152, 0
  %v155 = vand.u32 %v121, %v153
  %v158 = vand.u32 %v122, %v153
  %v161 = vand.u32 %v123, %v153
  %v164 = vand.u32 %v124, %v153
  %v167 = vand.u32 %v125, %v153
  %v170 = vand.u32 %v126, %v153
  %v173 = vand.u32 %v127, %v153
  %v176 = vand.u32 %v128, %v153
  %178 = vmatprep.subr.bf16.mxu0 %v114
  %179 = vmatpush1.bf16.msra.mxu0 %v113
  %180 = vmatprep.subr.bf16.mxu0 %v158
  %181 = vmatpush1.bf16.msra.mxu0 %v155
  %182 = vmatprep.subr.bf16.mxu0 0
  %183 = vmatpush1.bf16.msra.mxu0 0
  %184 = vmatprep.subr.bf16.mxu0 0
  %185 = vmatpush1.bf16.msra.mxu0 0
  %186 = vmatprep.subr.bf16.mxu0 0
  %187 = vmatpush1.bf16.msra.mxu0 0
  %188 = vmatprep.subr.bf16.mxu0 0
  %189 = vmatpush1.bf16.msra.mxu0 0
  %190 = vmatprep.subr.bf16.mxu0 0
  %191 = vmatpush1.bf16.msra.mxu0 0
  %192 = vmatprep.subr.bf16.mxu0 0
  %193 = vmatpush1.bf16.msra.mxu0 0
  %194 = vmatprep.subr.bf16.mxu0 0
  %195 = vmatpush1.bf16.msra.mxu0 0
  %196 = vmatprep.subr.bf16.mxu0 0
  %197 = vmatpush1.bf16.msra.mxu0 0
  %198 = vmatprep.subr.bf16.mxu0 0
  %199 = vmatpush1.bf16.msra.mxu0 0
  %200 = vmatprep.subr.bf16.mxu0 0
  %201 = vmatpush1.bf16.msra.mxu0 0
  %202 = vmatprep.subr.bf16.mxu0 0
  %203 = vmatpush1.bf16.msra.mxu0 0
  %204 = vmatprep.subr.bf16.mxu0 0
  %205 = vmatpush1.bf16.msra.mxu0 0
  %206 = vmatprep.subr.bf16.mxu0 0
  %207 = vmatpush1.bf16.msra.mxu0 0
  %208 = vmatprep.subr.bf16.mxu0 0
  %209 = vmatpush1.bf16.msra.mxu0 0
  %210 = vmatprep.mubr.bf16.mxu0 0
  %211 = vmatmul.mubr.bf16.gmra.mrb[0].mxu0 %v139
  %v212 = vpop.f32.mrb[0].mxu0
  %v213 = vadd.f32 0.0, %v212
  %v214 = vpop.f32.mrb[0].mxu0
  %v215 = vadd.f32 0.0, %v214
  %v216 = vpop.f32.mrb[0].mxu0
  %v217 = vadd.f32 0.0, %v216
  %v218 = vpop.f32.mrb[0].mxu0
  %v219 = vadd.f32 0.0, %v218
  %220 = vmatprep.mubr.bf16.mxu0 0
  %221 = vmatmul.mubr.bf16.gmra.mrb[0].mxu0 %v142
  %v222 = vpop.f32.mrb[0].mxu0
  %v223 = vadd.f32 0.0, %v222
  %v224 = vpop.f32.mrb[0].mxu0
  %v225 = vadd.f32 0.0, %v224
  %v226 = vpop.f32.mrb[0].mxu0
  %v227 = vadd.f32 0.0, %v226
  %v228 = vpop.f32.mrb[0].mxu0
  %v229 = vadd.f32 0.0, %v228
  %230 = vmatprep.mubr.bf16.mxu0 0
  %231 = vmatmul.mubr.bf16.gmra.mrb[0].mxu0 %v145
  %v232 = vpop.f32.mrb[0].mxu0
  %v233 = vadd.f32 0.0, %v232
  %v234 = vpop.f32.mrb[0].mxu0
  %v235 = vadd.f32 0.0, %v234
  %v236 = vpop.f32.mrb[0].mxu0
  %v237 = vadd.f32 0.0, %v236
  %v238 = vpop.f32.mrb[0].mxu0
  %v239 = vadd.f32 0.0, %v238
  %240 = vmatprep.mubr.bf16.mxu0 0
  %241 = vmatmul.mubr.bf16.gmra.mrb[0].mxu0 %v148
  %v242 = vpop.f32.mrb[0].mxu0
  %v243 = vadd.f32 0.0, %v242
  %v244 = vpop.f32.mrb[0].mxu0
  %v245 = vadd.f32 0.0, %v244
  %v246 = vpop.f32.mrb[0].mxu0
  %v247 = vadd.f32 0.0, %v246
  %v248 = vpop.f32.mrb[0].mxu0
  %v249 = vadd.f32 0.0, %v248
  %250 = vdwg.mxu0
  %251 = vmatprep.subr.bf16.mxu0 %v116
  %252 = vmatpush1.bf16.msra.mxu0 %v115
  %253 = vmatprep.subr.bf16.mxu0 %v164
  %254 = vmatpush1.bf16.msra.mxu0 %v161
  %255 = vmatprep.subr.bf16.mxu0 0
  %256 = vmatpush1.bf16.msra.mxu0 0
  %257 = vmatprep.subr.bf16.mxu0 0
  %258 = vmatpush1.bf16.msra.mxu0 0
  %259 = vmatprep.subr.bf16.mxu0 0
  %260 = vmatpush1.bf16.msra.mxu0 0
  %261 = vmatprep.subr.bf16.mxu0 0
  %262 = vmatpush1.bf16.msra.mxu0 0
  %263 = vmatprep.subr.bf16.mxu0 0
  %264 = vmatpush1.bf16.msra.mxu0 0
  %265 = vmatprep.subr.bf16.mxu0 0
  %266 = vmatpush1.bf16.msra.mxu0 0
  %267 = vmatprep.subr.bf16.mxu0 0
  %268 = vmatpush1.bf16.msra.mxu0 0
  %269 = vmatprep.subr.bf16.mxu0 0
  %270 = vmatpush1.bf16.msra.mxu0 0
  %271 = vmatprep.subr.bf16.mxu0 0
  %272 = vmatpush1.bf16.msra.mxu0 0
  %273 = vmatprep.subr.bf16.mxu0 0
  %274 = vmatpush1.bf16.msra.mxu0 0
  %275 = vmatprep.subr.bf16.mxu0 0
  %276 = vmatpush1.bf16.msra.mxu0 0
  %277 = vmatprep.subr.bf16.mxu0 0
  %278 = vmatpush1.bf16.msra.mxu0 0
  %279 = vmatprep.subr.bf16.mxu0 0
  %280 = vmatpush1.bf16.msra.mxu0 0
  %281 = vmatprep.subr.bf16.mxu0 0
  %282 = vmatpush1.bf16.msra.mxu0 0
  %283 = vmatprep.mubr.bf16.mxu0 0
  %284 = vmatmul.mubr.bf16.gmra.mrb[0].mxu0 %v139
  %v285 = vpop.f32.mrb[0].mxu0
  %v286 = vadd.f32 0.0, %v285
  %v287 = vpop.f32.mrb[0].mxu0
  %v288 = vadd.f32 0.0, %v287
  %v289 = vpop.f32.mrb[0].mxu0
  %v290 = vadd.f32 0.0, %v289
  %v291 = vpop.f32.mrb[0].mxu0
  %v292 = vadd.f32 0.0, %v291
  %293 = vmatprep.mubr.bf16.mxu0 0
  %294 = vmatmul.mubr.bf16.gmra.mrb[0].mxu0 %v142
  %v295 = vpop.f32.mrb[0].mxu0
  %v296 = vadd.f32 0.0, %v295
  %v297 = vpop.f32.mrb[0].mxu0
  %v298 = vadd.f32 0.0, %v297
  %v299 = vpop.f32.mrb[0].mxu0
  %v300 = vadd.f32 0.0, %v299
  %v301 = vpop.f32.mrb[0].mxu0
  %v302 = vadd.f32 0.0, %v301
  %303 = vmatprep.mubr.bf16.mxu0 0
  %304 = vmatmul.mubr.bf16.gmra.mrb[0].mxu0 %v145
  %v305 = vpop.f32.mrb[0].mxu0
  %v306 = vadd.f32 0.0, %v305
  %v307 = vpop.f32.mrb[0].mxu0
  %v308 = vadd.f32 0.0, %v307
  %v309 = vpop.f32.mrb[0].mxu0
  %v310 = vadd.f32 0.0, %v309
  %v311 = vpop.f32.mrb[0].mxu0
  %v312 = vadd.f32 0.0, %v311
  %313 = vmatprep.mubr.bf16.mxu0 0
  %314 = vmatmul.mubr.bf16.gmra.mrb[0].mxu0 %v148
  %v315 = vpop.f32.mrb[0].mxu0
  %v316 = vadd.f32 0.0, %v315
  %v317 = vpop.f32.mrb[0].mxu0
  %v318 = vadd.f32 0.0, %v317
  %v319 = vpop.f32.mrb[0].mxu0
  %v320 = vadd.f32 0.0, %v319
  %v321 = vpop.f32.mrb[0].mxu0
  %v322 = vadd.f32 0.0, %v321
  %323 = vdwg.mxu0
  %324 = vmatprep.subr.bf16.mxu0 %v118
  %325 = vmatpush1.bf16.msra.mxu0 %v117
  %326 = vmatprep.subr.bf16.mxu0 %v170
  %327 = vmatpush1.bf16.msra.mxu0 %v167
  %328 = vmatprep.subr.bf16.mxu0 0
  %329 = vmatpush1.bf16.msra.mxu0 0
  %330 = vmatprep.subr.bf16.mxu0 0
  %331 = vmatpush1.bf16.msra.mxu0 0
  %332 = vmatprep.subr.bf16.mxu0 0
  %333 = vmatpush1.bf16.msra.mxu0 0
  %334 = vmatprep.subr.bf16.mxu0 0
  %335 = vmatpush1.bf16.msra.mxu0 0
  %336 = vmatprep.subr.bf16.mxu0 0
  %337 = vmatpush1.bf16.msra.mxu0 0
  %338 = vmatprep.subr.bf16.mxu0 0
  %339 = vmatpush1.bf16.msra.mxu0 0
  %340 = vmatprep.subr.bf16.mxu0 0
  %341 = vmatpush1.bf16.msra.mxu0 0
  %342 = vmatprep.subr.bf16.mxu0 0
  %343 = vmatpush1.bf16.msra.mxu0 0
  %344 = vmatprep.subr.bf16.mxu0 0
  %345 = vmatpush1.bf16.msra.mxu0 0
  %346 = vmatprep.subr.bf16.mxu0 0
  %347 = vmatpush1.bf16.msra.mxu0 0
  %348 = vmatprep.subr.bf16.mxu0 0
  %349 = vmatpush1.bf16.msra.mxu0 0
  %350 = vmatprep.subr.bf16.mxu0 0
  %351 = vmatpush1.bf16.msra.mxu0 0
  %352 = vmatprep.subr.bf16.mxu0 0
  %353 = vmatpush1.bf16.msra.mxu0 0
  %354 = vmatprep.subr.bf16.mxu0 0
  %355 = vmatpush1.bf16.msra.mxu0 0
  %356 = vmatprep.mubr.bf16.mxu0 0
  %357 = vmatmul.mubr.bf16.gmra.mrb[0].mxu0 %v139
  %v358 = vpop.f32.mrb[0].mxu0
  %v359 = vadd.f32 0.0, %v358
  %v360 = vpop.f32.mrb[0].mxu0
  %v361 = vadd.f32 0.0, %v360
  %v362 = vpop.f32.mrb[0].mxu0
  %v363 = vadd.f32 0.0, %v362
  %v364 = vpop.f32.mrb[0].mxu0
  %v365 = vadd.f32 0.0, %v364
  %366 = vmatprep.mubr.bf16.mxu0 0
  %367 = vmatmul.mubr.bf16.gmra.mrb[0].mxu0 %v142
  %v368 = vpop.f32.mrb[0].mxu0
  %v369 = vadd.f32 0.0, %v368
  %v370 = vpop.f32.mrb[0].mxu0
  %v371 = vadd.f32 0.0, %v370
  %v372 = vpop.f32.mrb[0].mxu0
  %v373 = vadd.f32 0.0, %v372
  %v374 = vpop.f32.mrb[0].mxu0
  %v375 = vadd.f32 0.0, %v374
  %376 = vmatprep.mubr.bf16.mxu0 0
  %377 = vmatmul.mubr.bf16.gmra.mrb[0].mxu0 %v145
  %v378 = vpop.f32.mrb[0].mxu0
  %v379 = vadd.f32 0.0, %v378
  %v380 = vpop.f32.mrb[0].mxu0
  %v381 = vadd.f32 0.0, %v380
  %v382 = vpop.f32.mrb[0].mxu0
  %v383 = vadd.f32 0.0, %v382
  %v384 = vpop.f32.mrb[0].mxu0
  %v385 = vadd.f32 0.0, %v384
  %386 = vmatprep.mubr.bf16.mxu0 0
  %387 = vmatmul.mubr.bf16.gmra.mrb[0].mxu0 %v148
  %v388 = vpop.f32.mrb[0].mxu0
  %v389 = vadd.f32 0.0, %v388
  %v390 = vpop.f32.mrb[0].mxu0
  %v391 = vadd.f32 0.0, %v390
  %v392 = vpop.f32.mrb[0].mxu0
  %v393 = vadd.f32 0.0, %v392
  %v394 = vpop.f32.mrb[0].mxu0
  %v395 = vadd.f32 0.0, %v394
  %396 = vdwg.mxu0
  %397 = vmatprep.subr.bf16.mxu0 %v120
  %398 = vmatpush1.bf16.msra.mxu0 %v119
  %399 = vmatprep.subr.bf16.mxu0 %v176
  %400 = vmatpush1.bf16.msra.mxu0 %v173
  %401 = vmatprep.subr.bf16.mxu0 0
  %402 = vmatpush1.bf16.msra.mxu0 0
  %403 = vmatprep.subr.bf16.mxu0 0
  %404 = vmatpush1.bf16.msra.mxu0 0
  %405 = vmatprep.subr.bf16.mxu0 0
  %406 = vmatpush1.bf16.msra.mxu0 0
  %407 = vmatprep.subr.bf16.mxu0 0
  %408 = vmatpush1.bf16.msra.mxu0 0
  %409 = vmatprep.subr.bf16.mxu0 0
  %410 = vmatpush1.bf16.msra.mxu0 0
  %411 = vmatprep.subr.bf16.mxu0 0
  %412 = vmatpush1.bf16.msra.mxu0 0
  %413 = vmatprep.subr.bf16.mxu0 0
  %414 = vmatpush1.bf16.msra.mxu0 0
  %415 = vmatprep.subr.bf16.mxu0 0
  %416 = vmatpush1.bf16.msra.mxu0 0
  %417 = vmatprep.subr.bf16.mxu0 0
  %418 = vmatpush1.bf16.msra.mxu0 0
  %419 = vmatprep.subr.bf16.mxu0 0
  %420 = vmatpush1.bf16.msra.mxu0 0
  %421 = vmatprep.subr.bf16.mxu0 0
  %422 = vmatpush1.bf16.msra.mxu0 0
  %423 = vmatprep.subr.bf16.mxu0 0
  %424 = vmatpush1.bf16.msra.mxu0 0
  %425 = vmatprep.subr.bf16.mxu0 0
  %426 = vmatpush1.bf16.msra.mxu0 0
  %427 = vmatprep.subr.bf16.mxu0 0
  %428 = vmatpush1.bf16.msra.mxu0 0
  %429 = vmatprep.mubr.bf16.mxu0 0
  %430 = vmatmul.mubr.bf16.gmra.mrb[0].mxu0 %v139
  %v431 = vpop.f32.mrb[0].mxu0
  %v432 = vadd.f32 0.0, %v431
  %v433 = vpop.f32.mrb[0].mxu0
  %v434 = vadd.f32 0.0, %v433
  %v435 = vpop.f32.mrb[0].mxu0
  %v436 = vadd.f32 0.0, %v435
  %v437 = vpop.f32.mrb[0].mxu0
  %v438 = vadd.f32 0.0, %v437
  %439 = vmatprep.mubr.bf16.mxu0 0
  %440 = vmatmul.mubr.bf16.gmra.mrb[0].mxu0 %v142
  %v441 = vpop.f32.mrb[0].mxu0
  %v442 = vadd.f32 0.0, %v441
  %v443 = vpop.f32.mrb[0].mxu0
  %v444 = vadd.f32 0.0, %v443
  %v445 = vpop.f32.mrb[0].mxu0
  %v446 = vadd.f32 0.0, %v445
  %v447 = vpop.f32.mrb[0].mxu0
  %v448 = vadd.f32 0.0, %v447
  %449 = vmatprep.mubr.bf16.mxu0 0
  %450 = vmatmul.mubr.bf16.gmra.mrb[0].mxu0 %v145
  %v451 = vpop.f32.mrb[0].mxu0
  %v452 = vadd.f32 0.0, %v451
  %v453 = vpop.f32.mrb[0].mxu0
  %v454 = vadd.f32 0.0, %v453
  %v455 = vpop.f32.mrb[0].mxu0
  %v456 = vadd.f32 0.0, %v455
  %v457 = vpop.f32.mrb[0].mxu0
  %v458 = vadd.f32 0.0, %v457
  %459 = vmatprep.mubr.bf16.mxu0 0
  %460 = vmatmul.mubr.bf16.gmra.mrb[0].mxu0 %v148
  %v461 = vpop.f32.mrb[0].mxu0
  %v462 = vadd.f32 0.0, %v461
  %v463 = vpop.f32.mrb[0].mxu0
  %v464 = vadd.f32 0.0, %v463
  %v465 = vpop.f32.mrb[0].mxu0
  %v466 = vadd.f32 0.0, %v465
  %v467 = vpop.f32.mrb[0].mxu0
  %v468 = vadd.f32 0.0, %v467
  %469 = vdwg.mxu0
  %v470 = vld [vmem:[%s2] sm:$0xf]
  %v471 = vld [vmem:[%s2 + $0x4] sm:$0xf]
  %v472 = vld [vmem:[%s2 + $0x8] sm:$0xf]
  %v473 = vld [vmem:[%s2 + $0xc] sm:$0xf]
  %v478 = vunpack.c.l.b16 %v470
  %v479 = vunpack.c.l.b16 %v471
  %v480 = vunpack.c.l.b16 %v472
  %v481 = vunpack.c.l.b16 %v473
  %v482 = vpack.c.b16 %v479, %v478
  %v483 = vpack.c.b16 %v481, %v480
  %v485 = vsel %vm137, %v482, 0
  %v488 = vsel %vm137, %v483, 0
  %490 = vmatprep.subr.bf16.mxu0 0
  %491 = vmatpush1.bf16.msra.mxu0 %v113
  %492 = vmatprep.subr.bf16.mxu0 0
  %493 = vmatpush1.bf16.msra.mxu0 %v155
  %494 = vmatprep.subr.bf16.mxu0 0
  %495 = vmatpush1.bf16.msra.mxu0 0
  %496 = vmatprep.subr.bf16.mxu0 0
  %497 = vmatpush1.bf16.msra.mxu0 0
  %498 = vmatprep.subr.bf16.mxu0 0
  %499 = vmatpush1.bf16.msra.mxu0 0
  %500 = vmatprep.subr.bf16.mxu0 0
  %501 = vmatpush1.bf16.msra.mxu0 0
  %502 = vmatprep.subr.bf16.mxu0 0
  %503 = vmatpush1.bf16.msra.mxu0 0
  %504 = vmatprep.subr.bf16.mxu0 0
  %505 = vmatpush1.bf16.msra.mxu0 0
  %506 = vmatprep.subr.bf16.mxu0 0
  %507 = vmatpush1.bf16.msra.mxu0 0
  %508 = vmatprep.subr.bf16.mxu0 0
  %509 = vmatpush1.bf16.msra.mxu0 0
  %510 = vmatprep.subr.bf16.mxu0 0
  %511 = vmatpush1.bf16.msra.mxu0 0
  %512 = vmatprep.subr.bf16.mxu0 0
  %513 = vmatpush1.bf16.msra.mxu0 0
  %514 = vmatprep.subr.bf16.mxu0 0
  %515 = vmatpush1.bf16.msra.mxu0 0
  %516 = vmatprep.subr.bf16.mxu0 0
  %517 = vmatpush1.bf16.msra.mxu0 0
  %518 = vmatprep.subr.bf16.mxu0 0
  %519 = vmatpush1.bf16.msra.mxu0 0
  %520 = vmatprep.subr.bf16.mxu0 0
  %521 = vmatpush1.bf16.msra.mxu0 0
  %522 = vmatprep.mubr.bf16.mxu0 0
  %523 = vmatmul.mubr.bf16.gmra.mrb[0].mxu0 %v485
  %v524 = vpop.f32.mrb[0].mxu0
  %v525 = vadd.f32 0.0, %v524
  %v526 = vpop.f32.mrb[0].mxu0
  %v527 = vpop.f32.mrb[0].mxu0
  %v528 = vadd.f32 0.0, %v527
  %v529 = vpop.f32.mrb[0].mxu0
  %530 = vmatprep.mubr.bf16.mxu0 0
  %531 = vmatmul.mubr.bf16.gmra.mrb[0].mxu0 %v488
  %v532 = vpop.f32.mrb[0].mxu0
  %v533 = vadd.f32 0.0, %v532
  %v534 = vpop.f32.mrb[0].mxu0
  %v535 = vpop.f32.mrb[0].mxu0
  %v536 = vadd.f32 0.0, %v535
  %v537 = vpop.f32.mrb[0].mxu0
  %538 = vdwg.mxu0
  %v539 = vxor.u32 %v525, 2147483648
  %v540 = vxor.u32 %v528, 2147483648
  %v541 = vxor.u32 %v533, 2147483648
  %v542 = vxor.u32 %v536, 2147483648
  %v543 = vmul.f32 %v539, 1.442695
  %v544 = vpow.pop %v543
  %v545 = vmul.f32 %v540, 1.442695
  %v546 = vpow.pop %v545
  %v547 = vmul.f32 %v541, 1.442695
  %v548 = vpow.pop %v547
  %v549 = vmul.f32 %v542, 1.442695
  %v550 = vpow.pop %v549
  %v551 = vadd.f32 %v544, 1.0
  %v552 = vadd.f32 %v546, 1.0
  %v553 = vadd.f32 %v548, 1.0
  %v554 = vadd.f32 %v550, 1.0
  %v555 = vrcp.pop %v551
  %v556 = vmul.f32 1.0, %v555
  %v557 = vrcp.pop %v552
  %v558 = vmul.f32 1.0, %v557
  %v559 = vrcp.pop %v553
  %v560 = vmul.f32 1.0, %v559
  %v561 = vrcp.pop %v554
  %v562 = vmul.f32 1.0, %v561
  %v563 = vld [vmem:[%s3] sm:$0xff]
  %v564 = vld [vmem:[%s3 + $0x8] sm:$0xff]
  %v565 = vld [vmem:[%s3 + $0x10] sm:$0xff]
  %v566 = vld [vmem:[%s3 + $0x18] sm:$0xff]
  %568 = vset.pattern.permute.xlu0 0
  %569 = vperm.xlu0 %568, %v563
  %v570 = vpop.permute.xlu0 %569
  %573 = vset.pattern.permute.xlu0 0
  %574 = vperm.xlu0 %573, %v564
  %v575 = vpop.permute.xlu0 %574
  %578 = vset.pattern.permute.xlu0 0
  %579 = vperm.xlu0 %578, %v565
  %v580 = vpop.permute.xlu0 %579
  %583 = vset.pattern.permute.xlu0 0
  %584 = vperm.xlu0 %583, %v566
  %v585 = vpop.permute.xlu0 %584
  %v587 = vadd.f32 %v556, %v570
  %v588 = vadd.f32 %v558, %v575
  %v589 = vadd.f32 %v560, %v580
  %v590 = vadd.f32 %v562, %v585
  %v591 = vmul.f32 %v587, %v213
  %v592 = vmul.f32 %v588, %v217
  %v593 = vmul.f32 %v589, %v223
  %v594 = vmul.f32 %v590, %v227
  %v595 = vld [vmem:[%s4] sm:$0xff]
  %v596 = vld [vmem:[%s4 + $0x8] sm:$0xff]
  %v597 = vld [vmem:[%s4 + $0x10] sm:$0xff]
  %v598 = vld [vmem:[%s4 + $0x18] sm:$0xff]
  %600 = vset.pattern.permute.xlu0 0
  %601 = vperm.xlu0 %600, %v595
  %v602 = vpop.permute.xlu0 %601
  %605 = vset.pattern.permute.xlu0 0
  %606 = vperm.xlu0 %605, %v596
  %v607 = vpop.permute.xlu0 %606
  %610 = vset.pattern.permute.xlu0 0
  %611 = vperm.xlu0 %610, %v597
  %v612 = vpop.permute.xlu0 %611
  %615 = vset.pattern.permute.xlu0 0
  %616 = vperm.xlu0 %615, %v598
  %v617 = vpop.permute.xlu0 %616
  %v619 = vsub.f32 %v602, %v556
  %v620 = vsub.f32 %v607, %v558
  %v621 = vsub.f32 %v612, %v560
  %v622 = vsub.f32 %v617, %v562
  %v623 = vmul.f32 %v619, %v233
  %v624 = vmul.f32 %v620, %v237
  %v625 = vmul.f32 %v621, %v243
  %v626 = vmul.f32 %v622, %v247
  %v627 = vadd.f32 %v591, %v623
  %v628 = vadd.f32 %v592, %v624
  %v629 = vadd.f32 %v593, %v625
  %v630 = vadd.f32 %v594, %v626
  %v631 = vpack.c.bf16 %v628, %v627
  %v632 = vpack.c.bf16 %v630, %v629
  %v635 = vunpack.c.l.b16 %v631
  %v636 = vunpack.c.h.b16 %v631
  %v637 = vunpack.c.l.b16 %v632
  %v638 = vunpack.c.h.b16 %v632
  %v639 = vpack.c.b16 %v635, %v635
  %v640 = vpack.c.b16 %v636, %v636
  %v641 = vpack.c.b16 %v637, %v637
  %v642 = vpack.c.b16 %v638, %v638
  %647 = vst [vmem:[%s5] sm:$0xf] %v639
  %648 = vst [vmem:[%s5 + $0x4] sm:$0xf] %v640
  %649 = vst [vmem:[%s5 + $0x8] sm:$0xf] %v641
  %650 = vst [vmem:[%s5 + $0xc] sm:$0xf] %v642
  %s651 = scalar_lea.vmem %s2, 16
  %v652 = vld [vmem:[%s651] sm:$0xf]
  %v653 = vld [vmem:[%s651 + $0x4] sm:$0xf]
  %v654 = vld [vmem:[%s651 + $0x8] sm:$0xf]
  %v655 = vld [vmem:[%s651 + $0xc] sm:$0xf]
  %v660 = vunpack.c.l.b16 %v652
  %v661 = vunpack.c.l.b16 %v653
  %v662 = vunpack.c.l.b16 %v654
  %v663 = vunpack.c.l.b16 %v655
  %v664 = vpack.c.b16 %v661, %v660
  %v665 = vpack.c.b16 %v663, %v662
  %v667 = vsel %vm137, %v664, 0
  %v670 = vsel %vm137, %v665, 0
  %672 = vmatprep.subr.bf16.mxu0 0
  %673 = vmatpush1.bf16.msra.mxu0 %v114
  %674 = vmatprep.subr.bf16.mxu0 0
  %675 = vmatpush1.bf16.msra.mxu0 %v158
  %676 = vmatprep.subr.bf16.mxu0 0
  %677 = vmatpush1.bf16.msra.mxu0 0
  %678 = vmatprep.subr.bf16.mxu0 0
  %679 = vmatpush1.bf16.msra.mxu0 0
  %680 = vmatprep.subr.bf16.mxu0 0
  %681 = vmatpush1.bf16.msra.mxu0 0
  %682 = vmatprep.subr.bf16.mxu0 0
  %683 = vmatpush1.bf16.msra.mxu0 0
  %684 = vmatprep.subr.bf16.mxu0 0
  %685 = vmatpush1.bf16.msra.mxu0 0
  %686 = vmatprep.subr.bf16.mxu0 0
  %687 = vmatpush1.bf16.msra.mxu0 0
  %688 = vmatprep.subr.bf16.mxu0 0
  %689 = vmatpush1.bf16.msra.mxu0 0
  %690 = vmatprep.subr.bf16.mxu0 0
  %691 = vmatpush1.bf16.msra.mxu0 0
  %692 = vmatprep.subr.bf16.mxu0 0
  %693 = vmatpush1.bf16.msra.mxu0 0
  %694 = vmatprep.subr.bf16.mxu0 0
  %695 = vmatpush1.bf16.msra.mxu0 0
  %696 = vmatprep.subr.bf16.mxu0 0
  %697 = vmatpush1.bf16.msra.mxu0 0
  %698 = vmatprep.subr.bf16.mxu0 0
  %699 = vmatpush1.bf16.msra.mxu0 0
  %700 = vmatprep.subr.bf16.mxu0 0
  %701 = vmatpush1.bf16.msra.mxu0 0
  %702 = vmatprep.subr.bf16.mxu0 0
  %703 = vmatpush1.bf16.msra.mxu0 0
  %704 = vmatprep.mubr.bf16.mxu0 0
  %705 = vmatmul.mubr.bf16.gmra.mrb[0].mxu0 %v667
  %v706 = vpop.f32.mrb[0].mxu0
  %v707 = vadd.f32 0.0, %v706
  %v708 = vpop.f32.mrb[0].mxu0
  %v709 = vpop.f32.mrb[0].mxu0
  %v710 = vadd.f32 0.0, %v709
  %v711 = vpop.f32.mrb[0].mxu0
  %712 = vmatprep.mubr.bf16.mxu0 0
  %713 = vmatmul.mubr.bf16.gmra.mrb[0].mxu0 %v670
  %v714 = vpop.f32.mrb[0].mxu0
  %v715 = vadd.f32 0.0, %v714
  %v716 = vpop.f32.mrb[0].mxu0
  %v717 = vpop.f32.mrb[0].mxu0
  %v718 = vadd.f32 0.0, %v717
  %v719 = vpop.f32.mrb[0].mxu0
  %720 = vdwg.mxu0
  %v721 = vxor.u32 %v707, 2147483648
  %v722 = vxor.u32 %v710, 2147483648
  %v723 = vxor.u32 %v715, 2147483648
  %v724 = vxor.u32 %v718, 2147483648
  %v725 = vmul.f32 %v721, 1.442695
  %v726 = vpow.pop %v725
  %v727 = vmul.f32 %v722, 1.442695
  %v728 = vpow.pop %v727
  %v729 = vmul.f32 %v723, 1.442695
  %v730 = vpow.pop %v729
  %v731 = vmul.f32 %v724, 1.442695
  %v732 = vpow.pop %v731
  %v733 = vadd.f32 %v726, 1.0
  %v734 = vadd.f32 %v728, 1.0
  %v735 = vadd.f32 %v730, 1.0
  %v736 = vadd.f32 %v732, 1.0
  %v737 = vrcp.pop %v733
  %v738 = vmul.f32 1.0, %v737
  %v739 = vrcp.pop %v734
  %v740 = vmul.f32 1.0, %v739
  %v741 = vrcp.pop %v735
  %v742 = vmul.f32 1.0, %v741
  %v743 = vrcp.pop %v736
  %v744 = vmul.f32 1.0, %v743
  %s745 = scalar_lea.vmem %s3, 32
  %v746 = vld [vmem:[%s745] sm:$0xff]
  %v747 = vld [vmem:[%s745 + $0x8] sm:$0xff]
  %v748 = vld [vmem:[%s745 + $0x10] sm:$0xff]
  %v749 = vld [vmem:[%s745 + $0x18] sm:$0xff]
  %751 = vset.pattern.permute.xlu0 0
  %752 = vperm.xlu0 %751, %v746
  %v753 = vpop.permute.xlu0 %752
  %756 = vset.pattern.permute.xlu0 0
  %757 = vperm.xlu0 %756, %v747
  %v758 = vpop.permute.xlu0 %757
  %761 = vset.pattern.permute.xlu0 0
  %762 = vperm.xlu0 %761, %v748
  %v763 = vpop.permute.xlu0 %762
  %766 = vset.pattern.permute.xlu0 0
  %767 = vperm.xlu0 %766, %v749
  %v768 = vpop.permute.xlu0 %767
  %v770 = vadd.f32 %v738, %v753
  %v771 = vadd.f32 %v740, %v758
  %v772 = vadd.f32 %v742, %v763
  %v773 = vadd.f32 %v744, %v768
  %v774 = vmul.f32 %v770, %v215
  %v775 = vmul.f32 %v771, %v219
  %v776 = vmul.f32 %v772, %v225
  %v777 = vmul.f32 %v773, %v229
  %s778 = scalar_lea.vmem %s4, 32
  %v779 = vld [vmem:[%s778] sm:$0xff]
  %v780 = vld [vmem:[%s778 + $0x8] sm:$0xff]
  %v781 = vld [vmem:[%s778 + $0x10] sm:$0xff]
  %v782 = vld [vmem:[%s778 + $0x18] sm:$0xff]
  %784 = vset.pattern.permute.xlu0 0
  %785 = vperm.xlu0 %784, %v779
  %v786 = vpop.permute.xlu0 %785
  %789 = vset.pattern.permute.xlu0 0
  %790 = vperm.xlu0 %789, %v780
  %v791 = vpop.permute.xlu0 %790
  %794 = vset.pattern.permute.xlu0 0
  %795 = vperm.xlu0 %794, %v781
  %v796 = vpop.permute.xlu0 %795
  %799 = vset.pattern.permute.xlu0 0
  %800 = vperm.xlu0 %799, %v782
  %v801 = vpop.permute.xlu0 %800
  %v803 = vsub.f32 %v786, %v738
  %v804 = vsub.f32 %v791, %v740
  %v805 = vsub.f32 %v796, %v742
  %v806 = vsub.f32 %v801, %v744
  %v807 = vmul.f32 %v803, %v235
  %v808 = vmul.f32 %v804, %v239
  %v809 = vmul.f32 %v805, %v245
  %v810 = vmul.f32 %v806, %v249
  %v811 = vadd.f32 %v774, %v807
  %v812 = vadd.f32 %v775, %v808
  %v813 = vadd.f32 %v776, %v809
  %v814 = vadd.f32 %v777, %v810
  %v815 = vpack.c.bf16 %v812, %v811
  %v816 = vpack.c.bf16 %v814, %v813
  %v819 = vunpack.c.l.b16 %v815
  %v820 = vunpack.c.h.b16 %v815
  %v821 = vunpack.c.l.b16 %v816
  %v822 = vunpack.c.h.b16 %v816
  %v823 = vpack.c.b16 %v819, %v819
  %v824 = vpack.c.b16 %v820, %v820
  %v825 = vpack.c.b16 %v821, %v821
  %v826 = vpack.c.b16 %v822, %v822
  %s831 = scalar_lea.vmem %s5, 16
  %832 = vst [vmem:[%s831] sm:$0xf] %v823
  %833 = vst [vmem:[%s831 + $0x4] sm:$0xf] %v824
  %834 = vst [vmem:[%s831 + $0x8] sm:$0xf] %v825
  %835 = vst [vmem:[%s831 + $0xc] sm:$0xf] %v826
  %s836 = scalar_lea.vmem %s2, 32
  %v837 = vld [vmem:[%s836] sm:$0xf]
  %v838 = vld [vmem:[%s836 + $0x4] sm:$0xf]
  %v839 = vld [vmem:[%s836 + $0x8] sm:$0xf]
  %v840 = vld [vmem:[%s836 + $0xc] sm:$0xf]
  %v845 = vunpack.c.l.b16 %v837
  %v846 = vunpack.c.l.b16 %v838
  %v847 = vunpack.c.l.b16 %v839
  %v848 = vunpack.c.l.b16 %v840
  %v849 = vpack.c.b16 %v846, %v845
  %v850 = vpack.c.b16 %v848, %v847
  %v852 = vsel %vm137, %v849, 0
  %v855 = vsel %vm137, %v850, 0
  %857 = vmatprep.subr.bf16.mxu0 0
  %858 = vmatpush1.bf16.msra.mxu0 %v115
  %859 = vmatprep.subr.bf16.mxu0 0
  %860 = vmatpush1.bf16.msra.mxu0 %v161
  %861 = vmatprep.subr.bf16.mxu0 0
  %862 = vmatpush1.bf16.msra.mxu0 0
  %863 = vmatprep.subr.bf16.mxu0 0
  %864 = vmatpush1.bf16.msra.mxu0 0
  %865 = vmatprep.subr.bf16.mxu0 0
  %866 = vmatpush1.bf16.msra.mxu0 0
  %867 = vmatprep.subr.bf16.mxu0 0
  %868 = vmatpush1.bf16.msra.mxu0 0
  %869 = vmatprep.subr.bf16.mxu0 0
  %870 = vmatpush1.bf16.msra.mxu0 0
  %871 = vmatprep.subr.bf16.mxu0 0
  %872 = vmatpush1.bf16.msra.mxu0 0
  %873 = vmatprep.subr.bf16.mxu0 0
  %874 = vmatpush1.bf16.msra.mxu0 0
  %875 = vmatprep.subr.bf16.mxu0 0
  %876 = vmatpush1.bf16.msra.mxu0 0
  %877 = vmatprep.subr.bf16.mxu0 0
  %878 = vmatpush1.bf16.msra.mxu0 0
  %879 = vmatprep.subr.bf16.mxu0 0
  %880 = vmatpush1.bf16.msra.mxu0 0
  %881 = vmatprep.subr.bf16.mxu0 0
  %882 = vmatpush1.bf16.msra.mxu0 0
  %883 = vmatprep.subr.bf16.mxu0 0
  %884 = vmatpush1.bf16.msra.mxu0 0
  %885 = vmatprep.subr.bf16.mxu0 0
  %886 = vmatpush1.bf16.msra.mxu0 0
  %887 = vmatprep.subr.bf16.mxu0 0
  %888 = vmatpush1.bf16.msra.mxu0 0
  %889 = vmatprep.mubr.bf16.mxu0 0
  %890 = vmatmul.mubr.bf16.gmra.mrb[0].mxu0 %v852
  %v891 = vpop.f32.mrb[0].mxu0
  %v892 = vadd.f32 0.0, %v891
  %v893 = vpop.f32.mrb[0].mxu0
  %v894 = vpop.f32.mrb[0].mxu0
  %v895 = vadd.f32 0.0, %v894
  %v896 = vpop.f32.mrb[0].mxu0
  %897 = vmatprep.mubr.bf16.mxu0 0
  %898 = vmatmul.mubr.bf16.gmra.mrb[0].mxu0 %v855
  %v899 = vpop.f32.mrb[0].mxu0
  %v900 = vadd.f32 0.0, %v899
  %v901 = vpop.f32.mrb[0].mxu0
  %v902 = vpop.f32.mrb[0].mxu0
  %v903 = vadd.f32 0.0, %v902
  %v904 = vpop.f32.mrb[0].mxu0
  %905 = vdwg.mxu0
  %v906 = vxor.u32 %v892, 2147483648
  %v907 = vxor.u32 %v895, 2147483648
  %v908 = vxor.u32 %v900, 2147483648
  %v909 = vxor.u32 %v903, 2147483648
  %v910 = vmul.f32 %v906, 1.442695
  %v911 = vpow.pop %v910
  %v912 = vmul.f32 %v907, 1.442695
  %v913 = vpow.pop %v912
  %v914 = vmul.f32 %v908, 1.442695
  %v915 = vpow.pop %v914
  %v916 = vmul.f32 %v909, 1.442695
  %v917 = vpow.pop %v916
  %v918 = vadd.f32 %v911, 1.0
  %v919 = vadd.f32 %v913, 1.0
  %v920 = vadd.f32 %v915, 1.0
  %v921 = vadd.f32 %v917, 1.0
  %v922 = vrcp.pop %v918
  %v923 = vmul.f32 1.0, %v922
  %v924 = vrcp.pop %v919
  %v925 = vmul.f32 1.0, %v924
  %v926 = vrcp.pop %v920
  %v927 = vmul.f32 1.0, %v926
  %v928 = vrcp.pop %v921
  %v929 = vmul.f32 1.0, %v928
  %s930 = scalar_lea.vmem %s3, 64
  %v931 = vld [vmem:[%s930] sm:$0xff]
  %v932 = vld [vmem:[%s930 + $0x8] sm:$0xff]
  %v933 = vld [vmem:[%s930 + $0x10] sm:$0xff]
  %v934 = vld [vmem:[%s930 + $0x18] sm:$0xff]
  %936 = vset.pattern.permute.xlu0 0
  %937 = vperm.xlu0 %936, %v931
  %v938 = vpop.permute.xlu0 %937
  %941 = vset.pattern.permute.xlu0 0
  %942 = vperm.xlu0 %941, %v932
  %v943 = vpop.permute.xlu0 %942
  %946 = vset.pattern.permute.xlu0 0
  %947 = vperm.xlu0 %946, %v933
  %v948 = vpop.permute.xlu0 %947
  %951 = vset.pattern.permute.xlu0 0
  %952 = vperm.xlu0 %951, %v934
  %v953 = vpop.permute.xlu0 %952
  %v955 = vadd.f32 %v923, %v938
  %v956 = vadd.f32 %v925, %v943
  %v957 = vadd.f32 %v927, %v948
  %v958 = vadd.f32 %v929, %v953
  %v959 = vmul.f32 %v955, %v286
  %v960 = vmul.f32 %v956, %v290
  %v961 = vmul.f32 %v957, %v296
  %v962 = vmul.f32 %v958, %v300
  %s963 = scalar_lea.vmem %s4, 64
  %v964 = vld [vmem:[%s963] sm:$0xff]
  %v965 = vld [vmem:[%s963 + $0x8] sm:$0xff]
  %v966 = vld [vmem:[%s963 + $0x10] sm:$0xff]
  %v967 = vld [vmem:[%s963 + $0x18] sm:$0xff]
  %969 = vset.pattern.permute.xlu0 0
  %970 = vperm.xlu0 %969, %v964
  %v971 = vpop.permute.xlu0 %970
  %974 = vset.pattern.permute.xlu0 0
  %975 = vperm.xlu0 %974, %v965
  %v976 = vpop.permute.xlu0 %975
  %979 = vset.pattern.permute.xlu0 0
  %980 = vperm.xlu0 %979, %v966
  %v981 = vpop.permute.xlu0 %980
  %984 = vset.pattern.permute.xlu0 0
  %985 = vperm.xlu0 %984, %v967
  %v986 = vpop.permute.xlu0 %985
  %v988 = vsub.f32 %v971, %v923
  %v989 = vsub.f32 %v976, %v925
  %v990 = vsub.f32 %v981, %v927
  %v991 = vsub.f32 %v986, %v929
  %v992 = vmul.f32 %v988, %v306
  %v993 = vmul.f32 %v989, %v310
  %v994 = vmul.f32 %v990, %v316
  %v995 = vmul.f32 %v991, %v320
  %v996 = vadd.f32 %v959, %v992
  %v997 = vadd.f32 %v960, %v993
  %v998 = vadd.f32 %v961, %v994
  %v999 = vadd.f32 %v962, %v995
  %v1000 = vpack.c.bf16 %v997, %v996
  %v1001 = vpack.c.bf16 %v999, %v998
  %v1004 = vunpack.c.l.b16 %v1000
  %v1005 = vunpack.c.h.b16 %v1000
  %v1006 = vunpack.c.l.b16 %v1001
  %v1007 = vunpack.c.h.b16 %v1001
  %v1008 = vpack.c.b16 %v1004, %v1004
  %v1009 = vpack.c.b16 %v1005, %v1005
  %v1010 = vpack.c.b16 %v1006, %v1006
  %v1011 = vpack.c.b16 %v1007, %v1007
  %s1016 = scalar_lea.vmem %s5, 32
  %1017 = vst [vmem:[%s1016] sm:$0xf] %v1008
  %1018 = vst [vmem:[%s1016 + $0x4] sm:$0xf] %v1009
  %1019 = vst [vmem:[%s1016 + $0x8] sm:$0xf] %v1010
  %1020 = vst [vmem:[%s1016 + $0xc] sm:$0xf] %v1011
  %s1021 = scalar_lea.vmem %s2, 48
  %v1022 = vld [vmem:[%s1021] sm:$0xf]
  %v1023 = vld [vmem:[%s1021 + $0x4] sm:$0xf]
  %v1024 = vld [vmem:[%s1021 + $0x8] sm:$0xf]
  %v1025 = vld [vmem:[%s1021 + $0xc] sm:$0xf]
  %v1030 = vunpack.c.l.b16 %v1022
  %v1031 = vunpack.c.l.b16 %v1023
  %v1032 = vunpack.c.l.b16 %v1024
  %v1033 = vunpack.c.l.b16 %v1025
  %v1034 = vpack.c.b16 %v1031, %v1030
  %v1035 = vpack.c.b16 %v1033, %v1032
  %v1037 = vsel %vm137, %v1034, 0
  %v1040 = vsel %vm137, %v1035, 0
  %1042 = vmatprep.subr.bf16.mxu0 0
  %1043 = vmatpush1.bf16.msra.mxu0 %v116
  %1044 = vmatprep.subr.bf16.mxu0 0
  %1045 = vmatpush1.bf16.msra.mxu0 %v164
  %1046 = vmatprep.subr.bf16.mxu0 0
  %1047 = vmatpush1.bf16.msra.mxu0 0
  %1048 = vmatprep.subr.bf16.mxu0 0
  %1049 = vmatpush1.bf16.msra.mxu0 0
  %1050 = vmatprep.subr.bf16.mxu0 0
  %1051 = vmatpush1.bf16.msra.mxu0 0
  %1052 = vmatprep.subr.bf16.mxu0 0
  %1053 = vmatpush1.bf16.msra.mxu0 0
  %1054 = vmatprep.subr.bf16.mxu0 0
  %1055 = vmatpush1.bf16.msra.mxu0 0
  %1056 = vmatprep.subr.bf16.mxu0 0
  %1057 = vmatpush1.bf16.msra.mxu0 0
  %1058 = vmatprep.subr.bf16.mxu0 0
  %1059 = vmatpush1.bf16.msra.mxu0 0
  %1060 = vmatprep.subr.bf16.mxu0 0
  %1061 = vmatpush1.bf16.msra.mxu0 0
  %1062 = vmatprep.subr.bf16.mxu0 0
  %1063 = vmatpush1.bf16.msra.mxu0 0
  %1064 = vmatprep.subr.bf16.mxu0 0
  %1065 = vmatpush1.bf16.msra.mxu0 0
  %1066 = vmatprep.subr.bf16.mxu0 0
  %1067 = vmatpush1.bf16.msra.mxu0 0
  %1068 = vmatprep.subr.bf16.mxu0 0
  %1069 = vmatpush1.bf16.msra.mxu0 0
  %1070 = vmatprep.subr.bf16.mxu0 0
  %1071 = vmatpush1.bf16.msra.mxu0 0
  %1072 = vmatprep.subr.bf16.mxu0 0
  %1073 = vmatpush1.bf16.msra.mxu0 0
  %1074 = vmatprep.mubr.bf16.mxu0 0
  %1075 = vmatmul.mubr.bf16.gmra.mrb[0].mxu0 %v1037
  %v1076 = vpop.f32.mrb[0].mxu0
  %v1077 = vadd.f32 0.0, %v1076
  %v1078 = vpop.f32.mrb[0].mxu0
  %v1079 = vpop.f32.mrb[0].mxu0
  %v1080 = vadd.f32 0.0, %v1079
  %v1081 = vpop.f32.mrb[0].mxu0
  %1082 = vmatprep.mubr.bf16.mxu0 0
  %1083 = vmatmul.mubr.bf16.gmra.mrb[0].mxu0 %v1040
  %v1084 = vpop.f32.mrb[0].mxu0
  %v1085 = vadd.f32 0.0, %v1084
  %v1086 = vpop.f32.mrb[0].mxu0
  %v1087 = vpop.f32.mrb[0].mxu0
  %v1088 = vadd.f32 0.0, %v1087
  %v1089 = vpop.f32.mrb[0].mxu0
  %1090 = vdwg.mxu0
  %v1091 = vxor.u32 %v1077, 2147483648
  %v1092 = vxor.u32 %v1080, 2147483648
  %v1093 = vxor.u32 %v1085, 2147483648
  %v1094 = vxor.u32 %v1088, 2147483648
  %v1095 = vmul.f32 %v1091, 1.442695
  %v1096 = vpow.pop %v1095
  %v1097 = vmul.f32 %v1092, 1.442695
  %v1098 = vpow.pop %v1097
  %v1099 = vmul.f32 %v1093, 1.442695
  %v1100 = vpow.pop %v1099
  %v1101 = vmul.f32 %v1094, 1.442695
  %v1102 = vpow.pop %v1101
  %v1103 = vadd.f32 %v1096, 1.0
  %v1104 = vadd.f32 %v1098, 1.0
  %v1105 = vadd.f32 %v1100, 1.0
  %v1106 = vadd.f32 %v1102, 1.0
  %v1107 = vrcp.pop %v1103
  %v1108 = vmul.f32 1.0, %v1107
  %v1109 = vrcp.pop %v1104
  %v1110 = vmul.f32 1.0, %v1109
  %v1111 = vrcp.pop %v1105
  %v1112 = vmul.f32 1.0, %v1111
  %v1113 = vrcp.pop %v1106
  %v1114 = vmul.f32 1.0, %v1113
  %s1115 = scalar_lea.vmem %s3, 96
  %v1116 = vld [vmem:[%s1115] sm:$0xff]
  %v1117 = vld [vmem:[%s1115 + $0x8] sm:$0xff]
  %v1118 = vld [vmem:[%s1115 + $0x10] sm:$0xff]
  %v1119 = vld [vmem:[%s1115 + $0x18] sm:$0xff]
  %1121 = vset.pattern.permute.xlu0 0
  %1122 = vperm.xlu0 %1121, %v1116
  %v1123 = vpop.permute.xlu0 %1122
  %1126 = vset.pattern.permute.xlu0 0
  %1127 = vperm.xlu0 %1126, %v1117
  %v1128 = vpop.permute.xlu0 %1127
  %1131 = vset.pattern.permute.xlu0 0
  %1132 = vperm.xlu0 %1131, %v1118
  %v1133 = vpop.permute.xlu0 %1132
  %1136 = vset.pattern.permute.xlu0 0
  %1137 = vperm.xlu0 %1136, %v1119
  %v1138 = vpop.permute.xlu0 %1137
  %v1140 = vadd.f32 %v1108, %v1123
  %v1141 = vadd.f32 %v1110, %v1128
  %v1142 = vadd.f32 %v1112, %v1133
  %v1143 = vadd.f32 %v1114, %v1138
  %v1144 = vmul.f32 %v1140, %v288
  %v1145 = vmul.f32 %v1141, %v292
  %v1146 = vmul.f32 %v1142, %v298
  %v1147 = vmul.f32 %v1143, %v302
  %s1148 = scalar_lea.vmem %s4, 96
  %v1149 = vld [vmem:[%s1148] sm:$0xff]
  %v1150 = vld [vmem:[%s1148 + $0x8] sm:$0xff]
  %v1151 = vld [vmem:[%s1148 + $0x10] sm:$0xff]
  %v1152 = vld [vmem:[%s1148 + $0x18] sm:$0xff]
  %1154 = vset.pattern.permute.xlu0 0
  %1155 = vperm.xlu0 %1154, %v1149
  %v1156 = vpop.permute.xlu0 %1155
  %1159 = vset.pattern.permute.xlu0 0
  %1160 = vperm.xlu0 %1159, %v1150
  %v1161 = vpop.permute.xlu0 %1160
  %1164 = vset.pattern.permute.xlu0 0
  %1165 = vperm.xlu0 %1164, %v1151
  %v1166 = vpop.permute.xlu0 %1165
  %1169 = vset.pattern.permute.xlu0 0
  %1170 = vperm.xlu0 %1169, %v1152
  %v1171 = vpop.permute.xlu0 %1170
  %v1173 = vsub.f32 %v1156, %v1108
  %v1174 = vsub.f32 %v1161, %v1110
  %v1175 = vsub.f32 %v1166, %v1112
  %v1176 = vsub.f32 %v1171, %v1114
  %v1177 = vmul.f32 %v1173, %v308
  %v1178 = vmul.f32 %v1174, %v312
  %v1179 = vmul.f32 %v1175, %v318
  %v1180 = vmul.f32 %v1176, %v322
  %v1181 = vadd.f32 %v1144, %v1177
  %v1182 = vadd.f32 %v1145, %v1178
  %v1183 = vadd.f32 %v1146, %v1179
  %v1184 = vadd.f32 %v1147, %v1180
  %v1185 = vpack.c.bf16 %v1182, %v1181
  %v1186 = vpack.c.bf16 %v1184, %v1183
  %v1189 = vunpack.c.l.b16 %v1185
  %v1190 = vunpack.c.h.b16 %v1185
  %v1191 = vunpack.c.l.b16 %v1186
  %v1192 = vunpack.c.h.b16 %v1186
  %v1193 = vpack.c.b16 %v1189, %v1189
  %v1194 = vpack.c.b16 %v1190, %v1190
  %v1195 = vpack.c.b16 %v1191, %v1191
  %v1196 = vpack.c.b16 %v1192, %v1192
  %s1201 = scalar_lea.vmem %s5, 48
  %1202 = vst [vmem:[%s1201] sm:$0xf] %v1193
  %1203 = vst [vmem:[%s1201 + $0x4] sm:$0xf] %v1194
  %1204 = vst [vmem:[%s1201 + $0x8] sm:$0xf] %v1195
  %1205 = vst [vmem:[%s1201 + $0xc] sm:$0xf] %v1196
  %s1206 = scalar_lea.vmem %s2, 64
  %v1207 = vld [vmem:[%s1206] sm:$0xf]
  %v1208 = vld [vmem:[%s1206 + $0x4] sm:$0xf]
  %v1209 = vld [vmem:[%s1206 + $0x8] sm:$0xf]
  %v1210 = vld [vmem:[%s1206 + $0xc] sm:$0xf]
  %v1215 = vunpack.c.l.b16 %v1207
  %v1216 = vunpack.c.l.b16 %v1208
  %v1217 = vunpack.c.l.b16 %v1209
  %v1218 = vunpack.c.l.b16 %v1210
  %v1219 = vpack.c.b16 %v1216, %v1215
  %v1220 = vpack.c.b16 %v1218, %v1217
  %v1222 = vsel %vm137, %v1219, 0
  %v1225 = vsel %vm137, %v1220, 0
  %1227 = vmatprep.subr.bf16.mxu0 0
  %1228 = vmatpush1.bf16.msra.mxu0 %v117
  %1229 = vmatprep.subr.bf16.mxu0 0
  %1230 = vmatpush1.bf16.msra.mxu0 %v167
  %1231 = vmatprep.subr.bf16.mxu0 0
  %1232 = vmatpush1.bf16.msra.mxu0 0
  %1233 = vmatprep.subr.bf16.mxu0 0
  %1234 = vmatpush1.bf16.msra.mxu0 0
  %1235 = vmatprep.subr.bf16.mxu0 0
  %1236 = vmatpush1.bf16.msra.mxu0 0
  %1237 = vmatprep.subr.bf16.mxu0 0
  %1238 = vmatpush1.bf16.msra.mxu0 0
  %1239 = vmatprep.subr.bf16.mxu0 0
  %1240 = vmatpush1.bf16.msra.mxu0 0
  %1241 = vmatprep.subr.bf16.mxu0 0
  %1242 = vmatpush1.bf16.msra.mxu0 0
  %1243 = vmatprep.subr.bf16.mxu0 0
  %1244 = vmatpush1.bf16.msra.mxu0 0
  %1245 = vmatprep.subr.bf16.mxu0 0
  %1246 = vmatpush1.bf16.msra.mxu0 0
  %1247 = vmatprep.subr.bf16.mxu0 0
  %1248 = vmatpush1.bf16.msra.mxu0 0
  %1249 = vmatprep.subr.bf16.mxu0 0
  %1250 = vmatpush1.bf16.msra.mxu0 0
  %1251 = vmatprep.subr.bf16.mxu0 0
  %1252 = vmatpush1.bf16.msra.mxu0 0
  %1253 = vmatprep.subr.bf16.mxu0 0
  %1254 = vmatpush1.bf16.msra.mxu0 0
  %1255 = vmatprep.subr.bf16.mxu0 0
  %1256 = vmatpush1.bf16.msra.mxu0 0
  %1257 = vmatprep.subr.bf16.mxu0 0
  %1258 = vmatpush1.bf16.msra.mxu0 0
  %1259 = vmatprep.mubr.bf16.mxu0 0
  %1260 = vmatmul.mubr.bf16.gmra.mrb[0].mxu0 %v1222
  %v1261 = vpop.f32.mrb[0].mxu0
  %v1262 = vadd.f32 0.0, %v1261
  %v1263 = vpop.f32.mrb[0].mxu0
  %v1264 = vpop.f32.mrb[0].mxu0
  %v1265 = vadd.f32 0.0, %v1264
  %v1266 = vpop.f32.mrb[0].mxu0
  %1267 = vmatprep.mubr.bf16.mxu0 0
  %1268 = vmatmul.mubr.bf16.gmra.mrb[0].mxu0 %v1225
  %v1269 = vpop.f32.mrb[0].mxu0
  %v1270 = vadd.f32 0.0, %v1269
  %v1271 = vpop.f32.mrb[0].mxu0
  %v1272 = vpop.f32.mrb[0].mxu0
  %v1273 = vadd.f32 0.0, %v1272
  %v1274 = vpop.f32.mrb[0].mxu0
  %1275 = vdwg.mxu0
  %v1276 = vxor.u32 %v1262, 2147483648
  %v1277 = vxor.u32 %v1265, 2147483648
  %v1278 = vxor.u32 %v1270, 2147483648
  %v1279 = vxor.u32 %v1273, 2147483648
  %v1280 = vmul.f32 %v1276, 1.442695
  %v1281 = vpow.pop %v1280
  %v1282 = vmul.f32 %v1277, 1.442695
  %v1283 = vpow.pop %v1282
  %v1284 = vmul.f32 %v1278, 1.442695
  %v1285 = vpow.pop %v1284
  %v1286 = vmul.f32 %v1279, 1.442695
  %v1287 = vpow.pop %v1286
  %v1288 = vadd.f32 %v1281, 1.0
  %v1289 = vadd.f32 %v1283, 1.0
  %v1290 = vadd.f32 %v1285, 1.0
  %v1291 = vadd.f32 %v1287, 1.0
  %v1292 = vrcp.pop %v1288
  %v1293 = vmul.f32 1.0, %v1292
  %v1294 = vrcp.pop %v1289
  %v1295 = vmul.f32 1.0, %v1294
  %v1296 = vrcp.pop %v1290
  %v1297 = vmul.f32 1.0, %v1296
  %v1298 = vrcp.pop %v1291
  %v1299 = vmul.f32 1.0, %v1298
  %s1300 = scalar_lea.vmem %s3, 128
  %v1301 = vld [vmem:[%s1300] sm:$0xff]
  %v1302 = vld [vmem:[%s1300 + $0x8] sm:$0xff]
  %v1303 = vld [vmem:[%s1300 + $0x10] sm:$0xff]
  %v1304 = vld [vmem:[%s1300 + $0x18] sm:$0xff]
  %1306 = vset.pattern.permute.xlu0 0
  %1307 = vperm.xlu0 %1306, %v1301
  %v1308 = vpop.permute.xlu0 %1307
  %1311 = vset.pattern.permute.xlu0 0
  %1312 = vperm.xlu0 %1311, %v1302
  %v1313 = vpop.permute.xlu0 %1312
  %1316 = vset.pattern.permute.xlu0 0
  %1317 = vperm.xlu0 %1316, %v1303
  %v1318 = vpop.permute.xlu0 %1317
  %1321 = vset.pattern.permute.xlu0 0
  %1322 = vperm.xlu0 %1321, %v1304
  %v1323 = vpop.permute.xlu0 %1322
  %v1325 = vadd.f32 %v1293, %v1308
  %v1326 = vadd.f32 %v1295, %v1313
  %v1327 = vadd.f32 %v1297, %v1318
  %v1328 = vadd.f32 %v1299, %v1323
  %v1329 = vmul.f32 %v1325, %v359
  %v1330 = vmul.f32 %v1326, %v363
  %v1331 = vmul.f32 %v1327, %v369
  %v1332 = vmul.f32 %v1328, %v373
  %s1333 = scalar_lea.vmem %s4, 128
  %v1334 = vld [vmem:[%s1333] sm:$0xff]
  %v1335 = vld [vmem:[%s1333 + $0x8] sm:$0xff]
  %v1336 = vld [vmem:[%s1333 + $0x10] sm:$0xff]
  %v1337 = vld [vmem:[%s1333 + $0x18] sm:$0xff]
  %1339 = vset.pattern.permute.xlu0 0
  %1340 = vperm.xlu0 %1339, %v1334
  %v1341 = vpop.permute.xlu0 %1340
  %1344 = vset.pattern.permute.xlu0 0
  %1345 = vperm.xlu0 %1344, %v1335
  %v1346 = vpop.permute.xlu0 %1345
  %1349 = vset.pattern.permute.xlu0 0
  %1350 = vperm.xlu0 %1349, %v1336
  %v1351 = vpop.permute.xlu0 %1350
  %1354 = vset.pattern.permute.xlu0 0
  %1355 = vperm.xlu0 %1354, %v1337
  %v1356 = vpop.permute.xlu0 %1355
  %v1358 = vsub.f32 %v1341, %v1293
  %v1359 = vsub.f32 %v1346, %v1295
  %v1360 = vsub.f32 %v1351, %v1297
  %v1361 = vsub.f32 %v1356, %v1299
  %v1362 = vmul.f32 %v1358, %v379
  %v1363 = vmul.f32 %v1359, %v383
  %v1364 = vmul.f32 %v1360, %v389
  %v1365 = vmul.f32 %v1361, %v393
  %v1366 = vadd.f32 %v1329, %v1362
  %v1367 = vadd.f32 %v1330, %v1363
  %v1368 = vadd.f32 %v1331, %v1364
  %v1369 = vadd.f32 %v1332, %v1365
  %v1370 = vpack.c.bf16 %v1367, %v1366
  %v1371 = vpack.c.bf16 %v1369, %v1368
  %v1374 = vunpack.c.l.b16 %v1370
  %v1375 = vunpack.c.h.b16 %v1370
  %v1376 = vunpack.c.l.b16 %v1371
  %v1377 = vunpack.c.h.b16 %v1371
  %v1378 = vpack.c.b16 %v1374, %v1374
  %v1379 = vpack.c.b16 %v1375, %v1375
  %v1380 = vpack.c.b16 %v1376, %v1376
  %v1381 = vpack.c.b16 %v1377, %v1377
  %s1386 = scalar_lea.vmem %s5, 64
  %1387 = vst [vmem:[%s1386] sm:$0xf] %v1378
  %1388 = vst [vmem:[%s1386 + $0x4] sm:$0xf] %v1379
  %1389 = vst [vmem:[%s1386 + $0x8] sm:$0xf] %v1380
  %1390 = vst [vmem:[%s1386 + $0xc] sm:$0xf] %v1381
  %s1391 = scalar_lea.vmem %s2, 80
  %v1392 = vld [vmem:[%s1391] sm:$0xf]
  %v1393 = vld [vmem:[%s1391 + $0x4] sm:$0xf]
  %v1394 = vld [vmem:[%s1391 + $0x8] sm:$0xf]
  %v1395 = vld [vmem:[%s1391 + $0xc] sm:$0xf]
  %v1400 = vunpack.c.l.b16 %v1392
  %v1401 = vunpack.c.l.b16 %v1393
  %v1402 = vunpack.c.l.b16 %v1394
  %v1403 = vunpack.c.l.b16 %v1395
  %v1404 = vpack.c.b16 %v1401, %v1400
  %v1405 = vpack.c.b16 %v1403, %v1402
  %v1407 = vsel %vm137, %v1404, 0
  %v1410 = vsel %vm137, %v1405, 0
  %1412 = vmatprep.subr.bf16.mxu0 0
  %1413 = vmatpush1.bf16.msra.mxu0 %v118
  %1414 = vmatprep.subr.bf16.mxu0 0
  %1415 = vmatpush1.bf16.msra.mxu0 %v170
  %1416 = vmatprep.subr.bf16.mxu0 0
  %1417 = vmatpush1.bf16.msra.mxu0 0
  %1418 = vmatprep.subr.bf16.mxu0 0
  %1419 = vmatpush1.bf16.msra.mxu0 0
  %1420 = vmatprep.subr.bf16.mxu0 0
  %1421 = vmatpush1.bf16.msra.mxu0 0
  %1422 = vmatprep.subr.bf16.mxu0 0
  %1423 = vmatpush1.bf16.msra.mxu0 0
  %1424 = vmatprep.subr.bf16.mxu0 0
  %1425 = vmatpush1.bf16.msra.mxu0 0
  %1426 = vmatprep.subr.bf16.mxu0 0
  %1427 = vmatpush1.bf16.msra.mxu0 0
  %1428 = vmatprep.subr.bf16.mxu0 0
  %1429 = vmatpush1.bf16.msra.mxu0 0
  %1430 = vmatprep.subr.bf16.mxu0 0
  %1431 = vmatpush1.bf16.msra.mxu0 0
  %1432 = vmatprep.subr.bf16.mxu0 0
  %1433 = vmatpush1.bf16.msra.mxu0 0
  %1434 = vmatprep.subr.bf16.mxu0 0
  %1435 = vmatpush1.bf16.msra.mxu0 0
  %1436 = vmatprep.subr.bf16.mxu0 0
  %1437 = vmatpush1.bf16.msra.mxu0 0
  %1438 = vmatprep.subr.bf16.mxu0 0
  %1439 = vmatpush1.bf16.msra.mxu0 0
  %1440 = vmatprep.subr.bf16.mxu0 0
  %1441 = vmatpush1.bf16.msra.mxu0 0
  %1442 = vmatprep.subr.bf16.mxu0 0
  %1443 = vmatpush1.bf16.msra.mxu0 0
  %1444 = vmatprep.mubr.bf16.mxu0 0
  %1445 = vmatmul.mubr.bf16.gmra.mrb[0].mxu0 %v1407
  %v1446 = vpop.f32.mrb[0].mxu0
  %v1447 = vadd.f32 0.0, %v1446
  %v1448 = vpop.f32.mrb[0].mxu0
  %v1449 = vpop.f32.mrb[0].mxu0
  %v1450 = vadd.f32 0.0, %v1449
  %v1451 = vpop.f32.mrb[0].mxu0
  %1452 = vmatprep.mubr.bf16.mxu0 0
  %1453 = vmatmul.mubr.bf16.gmra.mrb[0].mxu0 %v1410
  %v1454 = vpop.f32.mrb[0].mxu0
  %v1455 = vadd.f32 0.0, %v1454
  %v1456 = vpop.f32.mrb[0].mxu0
  %v1457 = vpop.f32.mrb[0].mxu0
  %v1458 = vadd.f32 0.0, %v1457
  %v1459 = vpop.f32.mrb[0].mxu0
  %1460 = vdwg.mxu0
  %v1461 = vxor.u32 %v1447, 2147483648
  %v1462 = vxor.u32 %v1450, 2147483648
  %v1463 = vxor.u32 %v1455, 2147483648
  %v1464 = vxor.u32 %v1458, 2147483648
  %v1465 = vmul.f32 %v1461, 1.442695
  %v1466 = vpow.pop %v1465
  %v1467 = vmul.f32 %v1462, 1.442695
  %v1468 = vpow.pop %v1467
  %v1469 = vmul.f32 %v1463, 1.442695
  %v1470 = vpow.pop %v1469
  %v1471 = vmul.f32 %v1464, 1.442695
  %v1472 = vpow.pop %v1471
  %v1473 = vadd.f32 %v1466, 1.0
  %v1474 = vadd.f32 %v1468, 1.0
  %v1475 = vadd.f32 %v1470, 1.0
  %v1476 = vadd.f32 %v1472, 1.0
  %v1477 = vrcp.pop %v1473
  %v1478 = vmul.f32 1.0, %v1477
  %v1479 = vrcp.pop %v1474
  %v1480 = vmul.f32 1.0, %v1479
  %v1481 = vrcp.pop %v1475
  %v1482 = vmul.f32 1.0, %v1481
  %v1483 = vrcp.pop %v1476
  %v1484 = vmul.f32 1.0, %v1483
  %s1485 = scalar_lea.vmem %s3, 160
  %v1486 = vld [vmem:[%s1485] sm:$0xff]
  %v1487 = vld [vmem:[%s1485 + $0x8] sm:$0xff]
  %v1488 = vld [vmem:[%s1485 + $0x10] sm:$0xff]
  %v1489 = vld [vmem:[%s1485 + $0x18] sm:$0xff]
  %1491 = vset.pattern.permute.xlu0 0
  %1492 = vperm.xlu0 %1491, %v1486
  %v1493 = vpop.permute.xlu0 %1492
  %1496 = vset.pattern.permute.xlu0 0
  %1497 = vperm.xlu0 %1496, %v1487
  %v1498 = vpop.permute.xlu0 %1497
  %1501 = vset.pattern.permute.xlu0 0
  %1502 = vperm.xlu0 %1501, %v1488
  %v1503 = vpop.permute.xlu0 %1502
  %1506 = vset.pattern.permute.xlu0 0
  %1507 = vperm.xlu0 %1506, %v1489
  %v1508 = vpop.permute.xlu0 %1507
  %v1510 = vadd.f32 %v1478, %v1493
  %v1511 = vadd.f32 %v1480, %v1498
  %v1512 = vadd.f32 %v1482, %v1503
  %v1513 = vadd.f32 %v1484, %v1508
  %v1514 = vmul.f32 %v1510, %v361
  %v1515 = vmul.f32 %v1511, %v365
  %v1516 = vmul.f32 %v1512, %v371
  %v1517 = vmul.f32 %v1513, %v375
  %s1518 = scalar_lea.vmem %s4, 160
  %v1519 = vld [vmem:[%s1518] sm:$0xff]
  %v1520 = vld [vmem:[%s1518 + $0x8] sm:$0xff]
  %v1521 = vld [vmem:[%s1518 + $0x10] sm:$0xff]
  %v1522 = vld [vmem:[%s1518 + $0x18] sm:$0xff]
  %1524 = vset.pattern.permute.xlu0 0
  %1525 = vperm.xlu0 %1524, %v1519
  %v1526 = vpop.permute.xlu0 %1525
  %1529 = vset.pattern.permute.xlu0 0
  %1530 = vperm.xlu0 %1529, %v1520
  %v1531 = vpop.permute.xlu0 %1530
  %1534 = vset.pattern.permute.xlu0 0
  %1535 = vperm.xlu0 %1534, %v1521
  %v1536 = vpop.permute.xlu0 %1535
  %1539 = vset.pattern.permute.xlu0 0
  %1540 = vperm.xlu0 %1539, %v1522
  %v1541 = vpop.permute.xlu0 %1540
  %v1543 = vsub.f32 %v1526, %v1478
  %v1544 = vsub.f32 %v1531, %v1480
  %v1545 = vsub.f32 %v1536, %v1482
  %v1546 = vsub.f32 %v1541, %v1484
  %v1547 = vmul.f32 %v1543, %v381
  %v1548 = vmul.f32 %v1544, %v385
  %v1549 = vmul.f32 %v1545, %v391
  %v1550 = vmul.f32 %v1546, %v395
  %v1551 = vadd.f32 %v1514, %v1547
  %v1552 = vadd.f32 %v1515, %v1548
  %v1553 = vadd.f32 %v1516, %v1549
  %v1554 = vadd.f32 %v1517, %v1550
  %v1555 = vpack.c.bf16 %v1552, %v1551
  %v1556 = vpack.c.bf16 %v1554, %v1553
  %v1559 = vunpack.c.l.b16 %v1555
  %v1560 = vunpack.c.h.b16 %v1555
  %v1561 = vunpack.c.l.b16 %v1556
  %v1562 = vunpack.c.h.b16 %v1556
  %v1563 = vpack.c.b16 %v1559, %v1559
  %v1564 = vpack.c.b16 %v1560, %v1560
  %v1565 = vpack.c.b16 %v1561, %v1561
  %v1566 = vpack.c.b16 %v1562, %v1562
  %s1571 = scalar_lea.vmem %s5, 80
  %1572 = vst [vmem:[%s1571] sm:$0xf] %v1563
  %1573 = vst [vmem:[%s1571 + $0x4] sm:$0xf] %v1564
  %1574 = vst [vmem:[%s1571 + $0x8] sm:$0xf] %v1565
  %1575 = vst [vmem:[%s1571 + $0xc] sm:$0xf] %v1566
  %s1576 = scalar_lea.vmem %s2, 96
  %v1577 = vld [vmem:[%s1576] sm:$0xf]
  %v1578 = vld [vmem:[%s1576 + $0x4] sm:$0xf]
  %v1579 = vld [vmem:[%s1576 + $0x8] sm:$0xf]
  %v1580 = vld [vmem:[%s1576 + $0xc] sm:$0xf]
  %v1585 = vunpack.c.l.b16 %v1577
  %v1586 = vunpack.c.l.b16 %v1578
  %v1587 = vunpack.c.l.b16 %v1579
  %v1588 = vunpack.c.l.b16 %v1580
  %v1589 = vpack.c.b16 %v1586, %v1585
  %v1590 = vpack.c.b16 %v1588, %v1587
  %v1592 = vsel %vm137, %v1589, 0
  %v1595 = vsel %vm137, %v1590, 0
  %1597 = vmatprep.subr.bf16.mxu0 0
  %1598 = vmatpush1.bf16.msra.mxu0 %v119
  %1599 = vmatprep.subr.bf16.mxu0 0
  %1600 = vmatpush1.bf16.msra.mxu0 %v173
  %1601 = vmatprep.subr.bf16.mxu0 0
  %1602 = vmatpush1.bf16.msra.mxu0 0
  %1603 = vmatprep.subr.bf16.mxu0 0
  %1604 = vmatpush1.bf16.msra.mxu0 0
  %1605 = vmatprep.subr.bf16.mxu0 0
  %1606 = vmatpush1.bf16.msra.mxu0 0
  %1607 = vmatprep.subr.bf16.mxu0 0
  %1608 = vmatpush1.bf16.msra.mxu0 0
  %1609 = vmatprep.subr.bf16.mxu0 0
  %1610 = vmatpush1.bf16.msra.mxu0 0
  %1611 = vmatprep.subr.bf16.mxu0 0
  %1612 = vmatpush1.bf16.msra.mxu0 0
  %1613 = vmatprep.subr.bf16.mxu0 0
  %1614 = vmatpush1.bf16.msra.mxu0 0
  %1615 = vmatprep.subr.bf16.mxu0 0
  %1616 = vmatpush1.bf16.msra.mxu0 0
  %1617 = vmatprep.subr.bf16.mxu0 0
  %1618 = vmatpush1.bf16.msra.mxu0 0
  %1619 = vmatprep.subr.bf16.mxu0 0
  %1620 = vmatpush1.bf16.msra.mxu0 0
  %1621 = vmatprep.subr.bf16.mxu0 0
  %1622 = vmatpush1.bf16.msra.mxu0 0
  %1623 = vmatprep.subr.bf16.mxu0 0
  %1624 = vmatpush1.bf16.msra.mxu0 0
  %1625 = vmatprep.subr.bf16.mxu0 0
  %1626 = vmatpush1.bf16.msra.mxu0 0
  %1627 = vmatprep.subr.bf16.mxu0 0
  %1628 = vmatpush1.bf16.msra.mxu0 0
  %1629 = vmatprep.mubr.bf16.mxu0 0
  %1630 = vmatmul.mubr.bf16.gmra.mrb[0].mxu0 %v1592
  %v1631 = vpop.f32.mrb[0].mxu0
  %v1632 = vadd.f32 0.0, %v1631
  %v1633 = vpop.f32.mrb[0].mxu0
  %v1634 = vpop.f32.mrb[0].mxu0
  %v1635 = vadd.f32 0.0, %v1634
  %v1636 = vpop.f32.mrb[0].mxu0
  %1637 = vmatprep.mubr.bf16.mxu0 0
  %1638 = vmatmul.mubr.bf16.gmra.mrb[0].mxu0 %v1595
  %v1639 = vpop.f32.mrb[0].mxu0
  %v1640 = vadd.f32 0.0, %v1639
  %v1641 = vpop.f32.mrb[0].mxu0
  %v1642 = vpop.f32.mrb[0].mxu0
  %v1643 = vadd.f32 0.0, %v1642
  %v1644 = vpop.f32.mrb[0].mxu0
  %1645 = vdwg.mxu0
  %v1646 = vxor.u32 %v1632, 2147483648
  %v1647 = vxor.u32 %v1635, 2147483648
  %v1648 = vxor.u32 %v1640, 2147483648
  %v1649 = vxor.u32 %v1643, 2147483648
  %v1650 = vmul.f32 %v1646, 1.442695
  %v1651 = vpow.pop %v1650
  %v1652 = vmul.f32 %v1647, 1.442695
  %v1653 = vpow.pop %v1652
  %v1654 = vmul.f32 %v1648, 1.442695
  %v1655 = vpow.pop %v1654
  %v1656 = vmul.f32 %v1649, 1.442695
  %v1657 = vpow.pop %v1656
  %v1658 = vadd.f32 %v1651, 1.0
  %v1659 = vadd.f32 %v1653, 1.0
  %v1660 = vadd.f32 %v1655, 1.0
  %v1661 = vadd.f32 %v1657, 1.0
  %v1662 = vrcp.pop %v1658
  %v1663 = vmul.f32 1.0, %v1662
  %v1664 = vrcp.pop %v1659
  %v1665 = vmul.f32 1.0, %v1664
  %v1666 = vrcp.pop %v1660
  %v1667 = vmul.f32 1.0, %v1666
  %v1668 = vrcp.pop %v1661
  %v1669 = vmul.f32 1.0, %v1668
  %s1670 = scalar_lea.vmem %s3, 192
  %v1671 = vld [vmem:[%s1670] sm:$0xff]
  %v1672 = vld [vmem:[%s1670 + $0x8] sm:$0xff]
  %v1673 = vld [vmem:[%s1670 + $0x10] sm:$0xff]
  %v1674 = vld [vmem:[%s1670 + $0x18] sm:$0xff]
  %1676 = vset.pattern.permute.xlu0 0
  %1677 = vperm.xlu0 %1676, %v1671
  %v1678 = vpop.permute.xlu0 %1677
  %1681 = vset.pattern.permute.xlu0 0
  %1682 = vperm.xlu0 %1681, %v1672
  %v1683 = vpop.permute.xlu0 %1682
  %1686 = vset.pattern.permute.xlu0 0
  %1687 = vperm.xlu0 %1686, %v1673
  %v1688 = vpop.permute.xlu0 %1687
  %1691 = vset.pattern.permute.xlu0 0
  %1692 = vperm.xlu0 %1691, %v1674
  %v1693 = vpop.permute.xlu0 %1692
  %v1695 = vadd.f32 %v1663, %v1678
  %v1696 = vadd.f32 %v1665, %v1683
  %v1697 = vadd.f32 %v1667, %v1688
  %v1698 = vadd.f32 %v1669, %v1693
  %v1699 = vmul.f32 %v1695, %v432
  %v1700 = vmul.f32 %v1696, %v436
  %v1701 = vmul.f32 %v1697, %v442
  %v1702 = vmul.f32 %v1698, %v446
  %s1703 = scalar_lea.vmem %s4, 192
  %v1704 = vld [vmem:[%s1703] sm:$0xff]
  %v1705 = vld [vmem:[%s1703 + $0x8] sm:$0xff]
  %v1706 = vld [vmem:[%s1703 + $0x10] sm:$0xff]
  %v1707 = vld [vmem:[%s1703 + $0x18] sm:$0xff]
  %1709 = vset.pattern.permute.xlu0 0
  %1710 = vperm.xlu0 %1709, %v1704
  %v1711 = vpop.permute.xlu0 %1710
  %1714 = vset.pattern.permute.xlu0 0
  %1715 = vperm.xlu0 %1714, %v1705
  %v1716 = vpop.permute.xlu0 %1715
  %1719 = vset.pattern.permute.xlu0 0
  %1720 = vperm.xlu0 %1719, %v1706
  %v1721 = vpop.permute.xlu0 %1720
  %1724 = vset.pattern.permute.xlu0 0
  %1725 = vperm.xlu0 %1724, %v1707
  %v1726 = vpop.permute.xlu0 %1725
  %v1728 = vsub.f32 %v1711, %v1663
  %v1729 = vsub.f32 %v1716, %v1665
  %v1730 = vsub.f32 %v1721, %v1667
  %v1731 = vsub.f32 %v1726, %v1669
  %v1732 = vmul.f32 %v1728, %v452
  %v1733 = vmul.f32 %v1729, %v456
  %v1734 = vmul.f32 %v1730, %v462
  %v1735 = vmul.f32 %v1731, %v466
  %v1736 = vadd.f32 %v1699, %v1732
  %v1737 = vadd.f32 %v1700, %v1733
  %v1738 = vadd.f32 %v1701, %v1734
  %v1739 = vadd.f32 %v1702, %v1735
  %v1740 = vpack.c.bf16 %v1737, %v1736
  %v1741 = vpack.c.bf16 %v1739, %v1738
  %v1744 = vunpack.c.l.b16 %v1740
  %v1745 = vunpack.c.h.b16 %v1740
  %v1746 = vunpack.c.l.b16 %v1741
  %v1747 = vunpack.c.h.b16 %v1741
  %v1748 = vpack.c.b16 %v1744, %v1744
  %v1749 = vpack.c.b16 %v1745, %v1745
  %v1750 = vpack.c.b16 %v1746, %v1746
  %v1751 = vpack.c.b16 %v1747, %v1747
  %s1756 = scalar_lea.vmem %s5, 96
  %1757 = vst [vmem:[%s1756] sm:$0xf] %v1748
  %1758 = vst [vmem:[%s1756 + $0x4] sm:$0xf] %v1749
  %1759 = vst [vmem:[%s1756 + $0x8] sm:$0xf] %v1750
  %1760 = vst [vmem:[%s1756 + $0xc] sm:$0xf] %v1751
  %s1761 = scalar_lea.vmem %s2, 112
  %v1762 = vld [vmem:[%s1761] sm:$0xf]
  %v1763 = vld [vmem:[%s1761 + $0x4] sm:$0xf]
  %v1764 = vld [vmem:[%s1761 + $0x8] sm:$0xf]
  %v1765 = vld [vmem:[%s1761 + $0xc] sm:$0xf]
  %v1770 = vunpack.c.l.b16 %v1762
  %v1771 = vunpack.c.l.b16 %v1763
  %v1772 = vunpack.c.l.b16 %v1764
  %v1773 = vunpack.c.l.b16 %v1765
  %v1774 = vpack.c.b16 %v1771, %v1770
  %v1775 = vpack.c.b16 %v1773, %v1772
  %v1777 = vsel %vm137, %v1774, 0
  %v1780 = vsel %vm137, %v1775, 0
  %1782 = vmatprep.subr.bf16.mxu0 0
  %1783 = vmatpush1.bf16.msra.mxu0 %v120
  %1784 = vmatprep.subr.bf16.mxu0 0
  %1785 = vmatpush1.bf16.msra.mxu0 %v176
  %1786 = vmatprep.subr.bf16.mxu0 0
  %1787 = vmatpush1.bf16.msra.mxu0 0
  %1788 = vmatprep.subr.bf16.mxu0 0
  %1789 = vmatpush1.bf16.msra.mxu0 0
  %1790 = vmatprep.subr.bf16.mxu0 0
  %1791 = vmatpush1.bf16.msra.mxu0 0
  %1792 = vmatprep.subr.bf16.mxu0 0
  %1793 = vmatpush1.bf16.msra.mxu0 0
  %1794 = vmatprep.subr.bf16.mxu0 0
  %1795 = vmatpush1.bf16.msra.mxu0 0
  %1796 = vmatprep.subr.bf16.mxu0 0
  %1797 = vmatpush1.bf16.msra.mxu0 0
  %1798 = vmatprep.subr.bf16.mxu0 0
  %1799 = vmatpush1.bf16.msra.mxu0 0
  %1800 = vmatprep.subr.bf16.mxu0 0
  %1801 = vmatpush1.bf16.msra.mxu0 0
  %1802 = vmatprep.subr.bf16.mxu0 0
  %1803 = vmatpush1.bf16.msra.mxu0 0
  %1804 = vmatprep.subr.bf16.mxu0 0
  %1805 = vmatpush1.bf16.msra.mxu0 0
  %1806 = vmatprep.subr.bf16.mxu0 0
  %1807 = vmatpush1.bf16.msra.mxu0 0
  %1808 = vmatprep.subr.bf16.mxu0 0
  %1809 = vmatpush1.bf16.msra.mxu0 0
  %1810 = vmatprep.subr.bf16.mxu0 0
  %1811 = vmatpush1.bf16.msra.mxu0 0
  %1812 = vmatprep.subr.bf16.mxu0 0
  %1813 = vmatpush1.bf16.msra.mxu0 0
  %1814 = vmatprep.mubr.bf16.mxu0 0
  %1815 = vmatmul.mubr.bf16.gmra.mrb[0].mxu0 %v1777
  %v1816 = vpop.f32.mrb[0].mxu0
  %v1817 = vadd.f32 0.0, %v1816
  %v1818 = vpop.f32.mrb[0].mxu0
  %v1819 = vpop.f32.mrb[0].mxu0
  %v1820 = vadd.f32 0.0, %v1819
  %v1821 = vpop.f32.mrb[0].mxu0
  %1822 = vmatprep.mubr.bf16.mxu0 0
  %1823 = vmatmul.mubr.bf16.gmra.mrb[0].mxu0 %v1780
  %v1824 = vpop.f32.mrb[0].mxu0
  %v1825 = vadd.f32 0.0, %v1824
  %v1826 = vpop.f32.mrb[0].mxu0
  %v1827 = vpop.f32.mrb[0].mxu0
  %v1828 = vadd.f32 0.0, %v1827
  %v1829 = vpop.f32.mrb[0].mxu0
  %1830 = vdwg.mxu0
  %v1831 = vxor.u32 %v1817, 2147483648
  %v1832 = vxor.u32 %v1820, 2147483648
  %v1833 = vxor.u32 %v1825, 2147483648
  %v1834 = vxor.u32 %v1828, 2147483648
  %v1835 = vmul.f32 %v1831, 1.442695
  %v1836 = vpow.pop %v1835
  %v1837 = vmul.f32 %v1832, 1.442695
  %v1838 = vpow.pop %v1837
  %v1839 = vmul.f32 %v1833, 1.442695
  %v1840 = vpow.pop %v1839
  %v1841 = vmul.f32 %v1834, 1.442695
  %v1842 = vpow.pop %v1841
  %v1843 = vadd.f32 %v1836, 1.0
  %v1844 = vadd.f32 %v1838, 1.0
  %v1845 = vadd.f32 %v1840, 1.0
  %v1846 = vadd.f32 %v1842, 1.0
  %v1847 = vrcp.pop %v1843
  %v1848 = vmul.f32 1.0, %v1847
  %v1849 = vrcp.pop %v1844
  %v1850 = vmul.f32 1.0, %v1849
  %v1851 = vrcp.pop %v1845
  %v1852 = vmul.f32 1.0, %v1851
  %v1853 = vrcp.pop %v1846
  %v1854 = vmul.f32 1.0, %v1853
  %s1855 = scalar_lea.vmem %s3, 224
  %v1856 = vld [vmem:[%s1855] sm:$0xff]
  %v1857 = vld [vmem:[%s1855 + $0x8] sm:$0xff]
  %v1858 = vld [vmem:[%s1855 + $0x10] sm:$0xff]
  %v1859 = vld [vmem:[%s1855 + $0x18] sm:$0xff]
  %1861 = vset.pattern.permute.xlu0 0
  %1862 = vperm.xlu0 %1861, %v1856
  %v1863 = vpop.permute.xlu0 %1862
  %1866 = vset.pattern.permute.xlu0 0
  %1867 = vperm.xlu0 %1866, %v1857
  %v1868 = vpop.permute.xlu0 %1867
  %1871 = vset.pattern.permute.xlu0 0
  %1872 = vperm.xlu0 %1871, %v1858
  %v1873 = vpop.permute.xlu0 %1872
  %1876 = vset.pattern.permute.xlu0 0
  %1877 = vperm.xlu0 %1876, %v1859
  %v1878 = vpop.permute.xlu0 %1877
  %v1880 = vadd.f32 %v1848, %v1863
  %v1881 = vadd.f32 %v1850, %v1868
  %v1882 = vadd.f32 %v1852, %v1873
  %v1883 = vadd.f32 %v1854, %v1878
  %v1884 = vmul.f32 %v1880, %v434
  %v1885 = vmul.f32 %v1881, %v438
  %v1886 = vmul.f32 %v1882, %v444
  %v1887 = vmul.f32 %v1883, %v448
  %s1888 = scalar_lea.vmem %s4, 224
  %v1889 = vld [vmem:[%s1888] sm:$0xff]
  %v1890 = vld [vmem:[%s1888 + $0x8] sm:$0xff]
  %v1891 = vld [vmem:[%s1888 + $0x10] sm:$0xff]
  %v1892 = vld [vmem:[%s1888 + $0x18] sm:$0xff]
  %1894 = vset.pattern.permute.xlu0 0
  %1895 = vperm.xlu0 %1894, %v1889
  %v1896 = vpop.permute.xlu0 %1895
  %1899 = vset.pattern.permute.xlu0 0
  %1900 = vperm.xlu0 %1899, %v1890
  %v1901 = vpop.permute.xlu0 %1900
  %1904 = vset.pattern.permute.xlu0 0
  %1905 = vperm.xlu0 %1904, %v1891
  %v1906 = vpop.permute.xlu0 %1905
  %1909 = vset.pattern.permute.xlu0 0
  %1910 = vperm.xlu0 %1909, %v1892
  %v1911 = vpop.permute.xlu0 %1910
  %v1913 = vsub.f32 %v1896, %v1848
  %v1914 = vsub.f32 %v1901, %v1850
  %v1915 = vsub.f32 %v1906, %v1852
  %v1916 = vsub.f32 %v1911, %v1854
  %v1917 = vmul.f32 %v1913, %v454
  %v1918 = vmul.f32 %v1914, %v458
  %v1919 = vmul.f32 %v1915, %v464
  %v1920 = vmul.f32 %v1916, %v468
  %v1921 = vadd.f32 %v1884, %v1917
  %v1922 = vadd.f32 %v1885, %v1918
  %v1923 = vadd.f32 %v1886, %v1919
  %v1924 = vadd.f32 %v1887, %v1920
  %v1925 = vpack.c.bf16 %v1922, %v1921
  %v1926 = vpack.c.bf16 %v1924, %v1923
  %v1929 = vunpack.c.l.b16 %v1925
  %v1930 = vunpack.c.h.b16 %v1925
  %v1931 = vunpack.c.l.b16 %v1926
  %v1932 = vunpack.c.h.b16 %v1926
  %v1933 = vpack.c.b16 %v1929, %v1929
  %v1934 = vpack.c.b16 %v1930, %v1930
  %v1935 = vpack.c.b16 %v1931, %v1931
  %v1936 = vpack.c.b16 %v1932, %v1932
  %s1941 = scalar_lea.vmem %s5, 112
  %1942 = vst [vmem:[%s1941] sm:$0xf] %v1933
  %1943 = vst [vmem:[%s1941 + $0x4] sm:$0xf] %v1934
  %1944 = vst [vmem:[%s1941 + $0x8] sm:$0xf] %v1935
  %1945 = vst [vmem:[%s1941 + $0xc] sm:$0xf] %v1936
  // Predicated region
  $region22: #{_lambda_.1} parent=0 // pred_check
    _
  $region23: #{_lambda_.1} parent=0 // pred_check_branch
    %1947 = sbr.rel (0) target = $region25
  $region24: #{_lambda_.1} parent=0 // pred_region
    _
  $region25: #{_lambda_.1} parent=0 // pred_fallthru
    _
  // Predicated region
  $region26: #{_lambda_.1} parent=0 // pred_check
    _
  $region27: #{_lambda_.1} parent=0 // pred_check_branch
    %1949 = sbr.rel (0) target = $region29
  $region28: #{_lambda_.1} parent=0 // pred_region
    _
  $region29: #{_lambda_.1} parent=0 // pred_fallthru
    _

</llo_original>
